<compile_context>
chip_gen: v7x
topology: tpu7x:2x2x1
jax: 0.10.0
libtpu: 0.0.40
codegen_flags: <defaults>
</compile_context>

<pallas_src>
import functools

import jax
import jax.numpy as jnp
from jax.experimental import pallas as pl
from jax.experimental.pallas import tpu as pltpu  # noqa: F401  (TPU backend)


# ---------------------------------------------------------------------------
# Packed parameter-slab layout (shared by pack_params and the kernel)
# ---------------------------------------------------------------------------
def _slab_layout(in_dim, heads, hidden):
    """Row offsets of each parameter block inside the packed (R, H*C) f32 slab.
    Every section starts on an 8-sublane boundary (f32 tile alignment)."""
    HC = heads * hidden
    sections = [
        ("b1", 1), ("b2", 1), ("bout", 1),
        ("asrc1", heads), ("adst1", heads),
        ("asrc2", heads), ("adst2", heads),
        ("blkmask", heads),
        ("w1", in_dim), ("w2", HC), ("s2", HC), ("wout", HC),
    ]
    lay, off = {}, 0
    for name, n in sections:
        off = -(-off // 8) * 8
        lay[name] = (off, n)
        off += n
    total = -(-off // 8) * 8
    return lay, total


# ---------------------------------------------------------------------------
# Pallas kernel: full forward pass (gridless; all live data << 1 MiB VMEM)
# ---------------------------------------------------------------------------
def fused_gat_kernel(x_ref, pslab_ref, sbias_ref, o_ref, *, H, C, lay):
    """Fused gat1 -> gat2 -> [wire|terminal|action] logits.

    x_ref:     (N, F)        node features
    pslab_ref: (R, H*C)      packed parameter slab (see _slab_layout / pack_params)
    sbias_ref: (2, H, N, N)  per-layer additive score bias:
                             edge-attention term where edge (src j -> dst i) exists,
                             -1e30 elsewhere (adjacency mask folded in)
    o_ref:     (N, H*C)      lane-dense [wire | terminal | action | 0-pad] logits
    """
    HC = H * C
    N = x_ref.shape[0]

    def rows(name):
        start, n = lay[name]
        return pslab_ref[start:start + n, :]

    blkmask3 = rows("blkmask")[:, None, :]                            # (H, 1, HC)

    def elu(v):                                                       # F.elu (EUP)
        return jnp.where(v > 0.0, v, jnp.exp(jnp.minimum(v, 0.0)) - 1.0)

    def gat_core(x, w_name, asrc_name, adst_name, sbias):
        # One MXU matmul computes every head's values: (N, Fin) @ (Fin, H*C).
        xw = jnp.dot(x, rows(w_name), preferred_element_type=jnp.float32)      # (N, HC)

        # All heads' source scores in one MXU push (block-diagonal att rows);
        # result lanes = source node j, exactly the layout the score slab needs.
        a_src = jax.lax.dot_general(rows(asrc_name), xw, (((1,), (1,)), ((), ())),
                                    preferred_element_type=jnp.float32)        # (H, N)

        # All heads' destination scores with dst node on SUBLANES (no transpose):
        # adst rows are zero outside their head's lane block, so the full-width
        # multiply + lane reduce equals the per-head reduce, issued once.
        a_dst = jnp.sum(xw[None, :, :] * rows(adst_name)[:, None, :],
                        axis=-1, keepdims=True)                                 # (H, N, 1)

        # Fused all-head score slab + softmax over incoming edges (last axis).
        s = a_dst + a_src[:, None, :] + sbias                                   # (H, N, N)
        s = jnp.maximum(s, 0.2 * s)                                             # LeakyReLU(0.2)
        s = s - jnp.max(s, axis=-1, keepdims=True)
        p = jnp.exp(s)
        attn = p * pl.reciprocal(jnp.sum(p, axis=-1, keepdims=True), approx=True)

        # Head aggregation: ONE (H*N, N) @ (N, H*C) MXU matmul for all heads,
        # then each head's own lane block is selected with the precomputed block
        # mask (equivalent to the block-diagonal matmul, no lane slicing/concat).
        agg = jnp.dot(attn.reshape(H * N, N), xw,
                      preferred_element_type=jnp.float32)                       # (H*N, HC)
        return jnp.sum(agg.reshape(H, N, HC) * blkmask3, axis=0)                # (N, HC)

    # ---- layer 1: concat heads -> bias -> ELU --------------------------------
    cat1 = gat_core(x_ref[...], "w1", "asrc1", "adst1", sbias_ref[0])
    h1 = elu(cat1 + rows("b1"))                                                 # (N, HC)

    # ---- layer 2: head-mean via the precomputed S2 matmul -> bias -> ELU ------
    cat2 = gat_core(h1, "w2", "asrc2", "adst2", sbias_ref[1])
    v2 = jnp.dot(cat2, rows("s2"), preferred_element_type=jnp.float32) + rows("b2")
    h2 = elu(v2)                                                                # (N, HC), lanes >= C are exactly 0

    # ---- fused [wire|terminal|action] heads: one unmasked (N, 128) store ------
    o_ref[...] = (jnp.dot(h2, rows("wout"), preferred_element_type=jnp.float32)
                  + rows("bout"))

    # TODO(synk): for batched graphs add a leading batch grid axis with
    #   dimension_semantics=("parallel",) so v7x's second TensorCore is used.
    # TODO(synk): if N grows, flash-tile the (H, N, N) score slab, switch the dense
    #   -1e30 bias to scalar-prefetched edge lists, re-derive tile sizes for v7x's
    #   64 MiB VMEM, and store W2 / sbias in bf16 once DMA bytes (not descriptors)
    #   dominate; keep elementwise score/ELU math in f32 for v5e.


# ---------------------------------------------------------------------------
# One-time packing (OFF the per-step path)
# ---------------------------------------------------------------------------
def _head_block_rows(att):
    """(H, C) -> (H, H*C): att[h] placed in lane block h, zeros elsewhere."""
    H, C = att.shape
    return (jnp.eye(H, dtype=att.dtype)[:, :, None] * att[None, :, :]).reshape(H, H * C)


def pack_params(params):
    """Pack ALL kernel parameters into a single lane-dense (R, H*C) f32 slab
    (1 DMA descriptor instead of 13).  Pure function of params -> call once."""
    p1, p2 = params["gat1"], params["gat2"]
    H, C = p1["att_src"].shape
    HC = H * C
    in_dim = p1["W"].shape[0]
    assert HC % 128 == 0, "slab lane width (H*C) must be a multiple of 128"
    lay, total = _slab_layout(in_dim, H, C)

    # per-head lane-block mask (layer output selection)
    blkmask = _head_block_rows(jnp.ones((H, C), jnp.float32))
    # layer-2 head-mean matrix: lane block h -> lanes [0, C), scaled by 1/H
    s2 = jnp.pad(jnp.tile(jnp.eye(C, dtype=jnp.float32), (H, 1)) / H,
                 ((0, 0), (0, HC - C)))
    # fused + zero-padded output heads (hoisted out of the per-step path)
    wout = jnp.concatenate([params["wire_w"], params["term_w"], params["act_w"]], axis=1)
    bout = jnp.concatenate([params["wire_b"], params["term_b"], params["act_b"]])
    P = wout.shape[1]
    wout = jnp.pad(wout, ((0, HC - C), (0, HC - P)))
    bout = jnp.pad(bout, (0, HC - P))

    blocks = {
        "b1": p1["bias"].reshape(1, HC),
        "b2": jnp.pad(p2["bias"], (0, HC - C)).reshape(1, HC),
        "bout": bout.reshape(1, HC),
        "asrc1": _head_block_rows(p1["att_src"]),
        "adst1": _head_block_rows(p1["att_dst"]),
        "asrc2": _head_block_rows(p2["att_src"]),
        "adst2": _head_block_rows(p2["att_dst"]),
        "blkmask": blkmask,
        "w1": p1["W"],
        "w2": p2["W"],
        "s2": s2,
        "wout": wout,
    }
    slab = jnp.zeros((total, HC), jnp.float32)
    for name, val in blocks.items():
        start, n = lay[name]
        slab = slab.at[start:start + n, :].set(val.astype(jnp.float32))
    return slab


def add_self_loops_mean(edge_index, edge_attr, num_nodes):
    """PyG add_self_loops(fill_value='mean'): self-loop attr = mean of attrs of
    edges pointing to that node (0 if none)."""
    src, dst = edge_index[0], edge_index[1]
    ones = jnp.ones((src.shape[0],), jnp.float32)
    cnt = jax.ops.segment_sum(ones, dst, num_segments=num_nodes)
    ssum = jax.ops.segment_sum(edge_attr, dst, num_segments=num_nodes)
    loop_attr = ssum / jnp.maximum(cnt, 1.0)[:, None]
    loop_idx = jnp.arange(num_nodes, dtype=src.dtype)
    src = jnp.concatenate([src, loop_idx])
    dst = jnp.concatenate([dst, loop_idx])
    attr = jnp.concatenate([edge_attr, loop_attr], axis=0)
    return src, dst, attr


def _score_bias(src, dst, edge_attr, w_edge, att_edge, num_nodes):
    """Dense additive score bias per head: edge-attention contribution where an
    edge (src j -> dst i) exists, -1e30 (softmax mask) elsewhere."""
    H, C = att_edge.shape
    v = (w_edge.reshape(2, H, C) * att_edge[None]).sum(-1)            # (2, H)
    e_alpha = edge_attr @ v                                            # (E, H)
    bias = jnp.full((H, num_nodes, num_nodes), -1e30, jnp.float32)
    # TODO(synk): duplicate (src, dst) edges overwrite instead of each entering
    # the softmax separately (data-dependent scatter stays in this one-time glue).
    return bias.at[:, dst, src].set(e_alpha.T)                         # [H, dst, src]


def precompute_edge_bias(params, edge_index, edge_attr, num_nodes):
    """One-time, per-graph: self-loops ('mean' fill) + edge-attention term +
    adjacency mask folded into a single (2, H, N, N) additive score bias
    (one slice per GAT layer).  Runs OFF the per-step path."""
    src, dst, attr = add_self_loops_mean(edge_index, edge_attr, num_nodes)
    sb1 = _score_bias(src, dst, attr, params["gat1"]["W_edge"],
                      params["gat1"]["att_edge"], num_nodes)
    sb2 = _score_bias(src, dst, attr, params["gat2"]["W_edge"],
                      params["gat2"]["att_edge"], num_nodes)
    return jnp.stack([sb1, sb2], axis=0)


# ---------------------------------------------------------------------------
# Per-step forward: one gridless pallas_call (3 input DMAs) + 3 output slices
# ---------------------------------------------------------------------------
def multi_head_gat_forward(x, pslab, sbias, *, heads, hidden, in_dim, out_sizes):
    N = x.shape[0]
    HC = heads * hidden
    lay, _ = _slab_layout(in_dim, heads, hidden)
    # Gridless call: each operand's default BlockSpec is its full shape resident
    # in VMEM (total live data << 1 MiB), so no grid / index_maps are needed.
    out = pl.pallas_call(
        functools.partial(fused_gat_kernel, H=heads, C=hidden, lay=lay),
        out_shape=jax.ShapeDtypeStruct((N, HC), jnp.float32),
    )(x, pslab, sbias)
    nw, nt, na = out_sizes
    return out[:, :nw], out[:, nw:nw + nt], out[:, nw + nt:nw + nt + na]


# ---------------------------------------------------------------------------
# Parameter init (matches the simplified PyG GATConv parameterisation)
# ---------------------------------------------------------------------------
def init_params(key, in_dim, hidden, heads, num_wires, num_terminals, num_actions):
    keys = jax.random.split(key, 18)
    rnd = lambda k, shape: (0.2 * jax.random.normal(k, shape)).astype(jnp.float32)
    HC = heads * hidden
    return {
        "gat1": {
            "W": rnd(keys[0], (in_dim, HC)),
            "att_src": rnd(keys[1], (heads, hidden)),
            "att_dst": rnd(keys[2], (heads, hidden)),
            "W_edge": rnd(keys[3], (2, HC)),
            "att_edge": rnd(keys[4], (heads, hidden)),
            "bias": rnd(keys[5], (HC,)),
        },
        "gat2": {
            "W": rnd(keys[6], (HC, HC)),
            "att_src": rnd(keys[7], (heads, hidden)),
            "att_dst": rnd(keys[8], (heads, hidden)),
            "W_edge": rnd(keys[9], (2, HC)),
            "att_edge": rnd(keys[10], (heads, hidden)),
            "bias": rnd(keys[11], (hidden,)),
        },
        "wire_w": rnd(keys[12], (hidden, num_wires)),
        "wire_b": rnd(keys[13], (num_wires,)),
        "term_w": rnd(keys[14], (hidden, num_terminals)),
        "term_b": rnd(keys[15], (num_terminals,)),
        "act_w": rnd(keys[16], (hidden, num_actions)),
        "act_b": rnd(keys[17], (num_actions,)),
    }


if __name__ == "__main__":
    N, IN_DIM, HIDDEN, HEADS = 16, 8, 32, 4
    NUM_WIRES, NUM_TERMINALS, NUM_ACTIONS = 6, 5, 4

    key = jax.random.PRNGKey(0)
    kx, ke, kp = jax.random.split(key, 3)

    x = jax.random.normal(kx, (N, IN_DIM), jnp.float32)
    # deterministic edge set: edges j -> i with j = (i + off) % N, off in {1,3,5}
    dst = jnp.concatenate([jnp.arange(N, dtype=jnp.int32)] * 3)
    src = jnp.concatenate(
        [(jnp.arange(N, dtype=jnp.int32) + off) % N for off in (1, 3, 5)]
    )
    edge_index = jnp.stack([src, dst])                   # [2, E]
    edge_attr = jax.random.normal(ke, (src.shape[0], 2), jnp.float32)

    params = init_params(kp, IN_DIM, HIDDEN, HEADS,
                         NUM_WIRES, NUM_TERMINALS, NUM_ACTIONS)

    # --- one-time packing, OFF the per-step path (perf review items 1, 2, 9) ---
    pslab = pack_params(params)                                   # (R, 128) f32
    sbias = precompute_edge_bias(params, edge_index, edge_attr, N)  # (2, H, N, N)

    fwd = jax.jit(functools.partial(
        multi_head_gat_forward, heads=HEADS, hidden=HIDDEN, in_dim=IN_DIM,
        out_sizes=(NUM_WIRES, NUM_TERMINALS, NUM_ACTIONS)))

    wire, term, act = fwd(x, pslab, sbias)
    jax.block_until_ready((wire, term, act))

    assert wire.shape == (N, NUM_WIRES)
    assert term.shape == (N, NUM_TERMINALS)
    assert act.shape == (N, NUM_ACTIONS)
    assert (jnp.all(jnp.isfinite(wire)) and jnp.all(jnp.isfinite(term))
            and jnp.all(jnp.isfinite(act)))
    print("KERNEL_OK")
</pallas_src>

<mosaic_0001>
module attributes {stable_mosaic.version = 11 : i64} {
  func.func @fused_gat_kernel(%arg0: memref<16x8xf32, #tpu.memory_space<vmem>>, %arg1: memref<456x128xf32, #tpu.memory_space<vmem>>, %arg2: memref<2x4x16x16xf32, #tpu.memory_space<vmem>>, %arg3: memref<16x128xf32, #tpu.memory_space<vmem>>) attributes {dimension_semantics = [], scalar_prefetch = 0 : i64, scratch_operands = 0 : i64, tpu.core_type = #tpu.core_type<tc>} {
    %c56 = arith.constant 56 : index
    %c0 = arith.constant 0 : index
    %0 = vector.load %arg1[%c56, %c0] : memref<456x128xf32, #tpu.memory_space<vmem>>, vector<4x128xf32>
    %1 = vector.shape_cast %0 : vector<4x128xf32> to vector<4x1x128xf32>
    %c0_0 = arith.constant 0 : index
    %c0_1 = arith.constant 0 : index
    %2 = vector.load %arg0[%c0_0, %c0_1] : memref<16x8xf32, #tpu.memory_space<vmem>>, vector<16x8xf32>
    %c0_2 = arith.constant 0 : index
    %c0_3 = arith.constant 0 : index
    %c0_4 = arith.constant 0 : index
    %c0_5 = arith.constant 0 : index
    %3 = vector.load %arg2[%c0_2, %c0_3, %c0_4, %c0_5] : memref<2x4x16x16xf32, #tpu.memory_space<vmem>>, vector<1x4x16x16xf32>
    %4 = vector.shape_cast %3 : vector<1x4x16x16xf32> to vector<4x16x16xf32>
    %c64 = arith.constant 64 : index
    %c0_6 = arith.constant 0 : index
    %5 = vector.load %arg1[%c64, %c0_6] : memref<456x128xf32, #tpu.memory_space<vmem>>, vector<8x128xf32>
    %cst = arith.constant dense<0.000000e+00> : vector<16x128xf32>
    %6 = tpu.matmul %2, %5, %cst {dimension_numbers = #tpu.dot_dimension_numbers<[1], [0], [0], [1], [0, 0, 1, 1], [], []>} : vector<16x8xf32>, vector<8x128xf32>, vector<16x128xf32> -> vector<16x128xf32>
    %c24 = arith.constant 24 : index
    %c0_7 = arith.constant 0 : index
    %7 = vector.load %arg1[%c24, %c0_7] : memref<456x128xf32, #tpu.memory_space<vmem>>, vector<4x128xf32>
    %cst_8 = arith.constant dense<0.000000e+00> : vector<4x16xf32>
    %8 = tpu.matmul %7, %6, %cst_8 {dimension_numbers = #tpu.dot_dimension_numbers<[1], [1], [0], [0], [0, 0, 1, 0], [], []>} : vector<4x128xf32>, vector<16x128xf32>, vector<4x16xf32> -> vector<4x16xf32>
    %9 = vector.shape_cast %6 : vector<16x128xf32> to vector<1x16x128xf32>
    %c32 = arith.constant 32 : index
    %c0_9 = arith.constant 0 : index
    %10 = vector.load %arg1[%c32, %c0_9] : memref<456x128xf32, #tpu.memory_space<vmem>>, vector<4x128xf32>
    %11 = vector.shape_cast %10 : vector<4x128xf32> to vector<4x1x128xf32>
    %12 = vector.broadcast %9 : vector<1x16x128xf32> to vector<4x16x128xf32>
    %13 = vector.broadcast %11 : vector<4x1x128xf32> to vector<4x16x128xf32>
    %14 = arith.mulf %12, %13 : vector<4x16x128xf32>
    %cst_10 = arith.constant dense<0.000000e+00> : vector<4x16xf32>
    %15 = vector.multi_reduction <add>, %14, %cst_10 [2] : vector<4x16x128xf32> to vector<4x16xf32>
    %16 = vector.shape_cast %15 : vector<4x16xf32> to vector<4x16x1xf32>
    %17 = vector.shape_cast %8 : vector<4x16xf32> to vector<4x1x16xf32>
    %18 = vector.broadcast %16 : vector<4x16x1xf32> to vector<4x16x16xf32>
    %19 = vector.broadcast %17 : vector<4x1x16xf32> to vector<4x16x16xf32>
    %20 = arith.addf %18, %19 : vector<4x16x16xf32>
    %21 = arith.addf %20, %4 : vector<4x16x16xf32>
    %cst_11 = arith.constant 2.000000e-01 : f32
    %22 = vector.broadcast %cst_11 : f32 to vector<4x16x16xf32>
    %23 = arith.mulf %22, %21 : vector<4x16x16xf32>
    %24 = arith.maximumf %21, %23 : vector<4x16x16xf32>
    %cst_12 = arith.constant dense<0xFF800000> : vector<4x16xf32>
    %25 = vector.multi_reduction <maximumf>, %24, %cst_12 [2] : vector<4x16x16xf32> to vector<4x16xf32>
    %26 = vector.shape_cast %25 : vector<4x16xf32> to vector<4x16x1xf32>
    %27 = vector.broadcast %26 : vector<4x16x1xf32> to vector<4x16x16xf32>
    %28 = arith.subf %24, %27 : vector<4x16x16xf32>
    %29 = math.exp %28 : vector<4x16x16xf32>
    %cst_13 = arith.constant dense<0.000000e+00> : vector<4x16xf32>
    %30 = vector.multi_reduction <add>, %29, %cst_13 [2] : vector<4x16x16xf32> to vector<4x16xf32>
    %31 = vector.shape_cast %30 : vector<4x16xf32> to vector<4x16x1xf32>
    %32 = tpu.reciprocal %31 {approx = true} : vector<4x16x1xf32> -> vector<4x16x1xf32>
    %33 = vector.broadcast %32 : vector<4x16x1xf32> to vector<4x16x16xf32>
    %34 = arith.mulf %29, %33 : vector<4x16x16xf32>
    %35 = vector.shape_cast %34 : vector<4x16x16xf32> to vector<64x16xf32>
    %cst_14 = arith.constant dense<0.000000e+00> : vector<64x128xf32>
    %36 = tpu.matmul %35, %6, %cst_14 {dimension_numbers = #tpu.dot_dimension_numbers<[1], [0], [0], [1], [0, 0, 1, 1], [], []>} : vector<64x16xf32>, vector<16x128xf32>, vector<64x128xf32> -> vector<64x128xf32>
    %37 = vector.shape_cast %36 : vector<64x128xf32> to vector<4x16x128xf32>
    %38 = vector.broadcast %1 : vector<4x1x128xf32> to vector<4x16x128xf32>
    %39 = arith.mulf %37, %38 : vector<4x16x128xf32>
    %cst_15 = arith.constant dense<0.000000e+00> : vector<16x128xf32>
    %40 = vector.multi_reduction <add>, %39, %cst_15 [0] : vector<4x16x128xf32> to vector<16x128xf32>
    %c0_16 = arith.constant 0 : index
    %c0_17 = arith.constant 0 : index
    %41 = vector.load %arg1[%c0_16, %c0_17] : memref<456x128xf32, #tpu.memory_space<vmem>>, vector<1x128xf32>
    %42 = vector.broadcast %41 : vector<1x128xf32> to vector<16x128xf32>
    %43 = arith.addf %40, %42 : vector<16x128xf32>
    %cst_18 = arith.constant 0.000000e+00 : f32
    %44 = vector.broadcast %cst_18 : f32 to vector<16x128xf32>
    %45 = arith.cmpf ogt, %43, %44 : vector<16x128xf32>
    %cst_19 = arith.constant 0.000000e+00 : f32
    %46 = vector.broadcast %cst_19 : f32 to vector<16x128xf32>
    %47 = arith.minimumf %43, %46 : vector<16x128xf32>
    %48 = math.exp %47 : vector<16x128xf32>
    %cst_20 = arith.constant 1.000000e+00 : f32
    %49 = vector.broadcast %cst_20 : f32 to vector<16x128xf32>
    %50 = arith.subf %48, %49 : vector<16x128xf32>
    %51 = arith.select %45, %43, %50 : vector<16x128xi1>, vector<16x128xf32>
    %c1 = arith.constant 1 : index
    %c0_21 = arith.constant 0 : index
    %c0_22 = arith.constant 0 : index
    %c0_23 = arith.constant 0 : index
    %52 = vector.load %arg2[%c1, %c0_21, %c0_22, %c0_23] : memref<2x4x16x16xf32, #tpu.memory_space<vmem>>, vector<1x4x16x16xf32>
    %53 = vector.shape_cast %52 : vector<1x4x16x16xf32> to vector<4x16x16xf32>
    %c72 = arith.constant 72 : index
    %c0_24 = arith.constant 0 : index
    %54 = vector.load %arg1[%c72, %c0_24] : memref<456x128xf32, #tpu.memory_space<vmem>>, vector<128x128xf32>
    %cst_25 = arith.constant dense<0.000000e+00> : vector<16x128xf32>
    %55 = tpu.matmul %51, %54, %cst_25 {dimension_numbers = #tpu.dot_dimension_numbers<[1], [0], [0], [1], [0, 0, 1, 1], [], []>} : vector<16x128xf32>, vector<128x128xf32>, vector<16x128xf32> -> vector<16x128xf32>
    %c40 = arith.constant 40 : index
    %c0_26 = arith.constant 0 : index
    %56 = vector.load %arg1[%c40, %c0_26] : memref<456x128xf32, #tpu.memory_space<vmem>>, vector<4x128xf32>
    %cst_27 = arith.constant dense<0.000000e+00> : vector<4x16xf32>
    %57 = tpu.matmul %56, %55, %cst_27 {dimension_numbers = #tpu.dot_dimension_numbers<[1], [1], [0], [0], [0, 0, 1, 0], [], []>} : vector<4x128xf32>, vector<16x128xf32>, vector<4x16xf32> -> vector<4x16xf32>
    %58 = vector.shape_cast %55 : vector<16x128xf32> to vector<1x16x128xf32>
    %c48 = arith.constant 48 : index
    %c0_28 = arith.constant 0 : index
    %59 = vector.load %arg1[%c48, %c0_28] : memref<456x128xf32, #tpu.memory_space<vmem>>, vector<4x128xf32>
    %60 = vector.shape_cast %59 : vector<4x128xf32> to vector<4x1x128xf32>
    %61 = vector.broadcast %58 : vector<1x16x128xf32> to vector<4x16x128xf32>
    %62 = vector.broadcast %60 : vector<4x1x128xf32> to vector<4x16x128xf32>
    %63 = arith.mulf %61, %62 : vector<4x16x128xf32>
    %cst_29 = arith.constant dense<0.000000e+00> : vector<4x16xf32>
    %64 = vector.multi_reduction <add>, %63, %cst_29 [2] : vector<4x16x128xf32> to vector<4x16xf32>
    %65 = vector.shape_cast %64 : vector<4x16xf32> to vector<4x16x1xf32>
    %66 = vector.shape_cast %57 : vector<4x16xf32> to vector<4x1x16xf32>
    %67 = vector.broadcast %65 : vector<4x16x1xf32> to vector<4x16x16xf32>
    %68 = vector.broadcast %66 : vector<4x1x16xf32> to vector<4x16x16xf32>
    %69 = arith.addf %67, %68 : vector<4x16x16xf32>
    %70 = arith.addf %69, %53 : vector<4x16x16xf32>
    %cst_30 = arith.constant 2.000000e-01 : f32
    %71 = vector.broadcast %cst_30 : f32 to vector<4x16x16xf32>
    %72 = arith.mulf %71, %70 : vector<4x16x16xf32>
    %73 = arith.maximumf %70, %72 : vector<4x16x16xf32>
    %cst_31 = arith.constant dense<0xFF800000> : vector<4x16xf32>
    %74 = vector.multi_reduction <maximumf>, %73, %cst_31 [2] : vector<4x16x16xf32> to vector<4x16xf32>
    %75 = vector.shape_cast %74 : vector<4x16xf32> to vector<4x16x1xf32>
    %76 = vector.broadcast %75 : vector<4x16x1xf32> to vector<4x16x16xf32>
    %77 = arith.subf %73, %76 : vector<4x16x16xf32>
    %78 = math.exp %77 : vector<4x16x16xf32>
    %cst_32 = arith.constant dense<0.000000e+00> : vector<4x16xf32>
    %79 = vector.multi_reduction <add>, %78, %cst_32 [2] : vector<4x16x16xf32> to vector<4x16xf32>
    %80 = vector.shape_cast %79 : vector<4x16xf32> to vector<4x16x1xf32>
    %81 = tpu.reciprocal %80 {approx = true} : vector<4x16x1xf32> -> vector<4x16x1xf32>
    %82 = vector.broadcast %81 : vector<4x16x1xf32> to vector<4x16x16xf32>
    %83 = arith.mulf %78, %82 : vector<4x16x16xf32>
    %84 = vector.shape_cast %83 : vector<4x16x16xf32> to vector<64x16xf32>
    %cst_33 = arith.constant dense<0.000000e+00> : vector<64x128xf32>
    %85 = tpu.matmul %84, %55, %cst_33 {dimension_numbers = #tpu.dot_dimension_numbers<[1], [0], [0], [1], [0, 0, 1, 1], [], []>} : vector<64x16xf32>, vector<16x128xf32>, vector<64x128xf32> -> vector<64x128xf32>
    %86 = vector.shape_cast %85 : vector<64x128xf32> to vector<4x16x128xf32>
    %87 = vector.broadcast %1 : vector<4x1x128xf32> to vector<4x16x128xf32>
    %88 = arith.mulf %86, %87 : vector<4x16x128xf32>
    %cst_34 = arith.constant dense<0.000000e+00> : vector<16x128xf32>
    %89 = vector.multi_reduction <add>, %88, %cst_34 [0] : vector<4x16x128xf32> to vector<16x128xf32>
    %c200 = arith.constant 200 : index
    %c0_35 = arith.constant 0 : index
    %90 = vector.load %arg1[%c200, %c0_35] : memref<456x128xf32, #tpu.memory_space<vmem>>, vector<128x128xf32>
    %cst_36 = arith.constant dense<0.000000e+00> : vector<16x128xf32>
    %91 = tpu.matmul %89, %90, %cst_36 {dimension_numbers = #tpu.dot_dimension_numbers<[1], [0], [0], [1], [0, 0, 1, 1], [], []>} : vector<16x128xf32>, vector<128x128xf32>, vector<16x128xf32> -> vector<16x128xf32>
    %c8 = arith.constant 8 : index
    %c0_37 = arith.constant 0 : index
    %92 = vector.load %arg1[%c8, %c0_37] : memref<456x128xf32, #tpu.memory_space<vmem>>, vector<1x128xf32>
    %93 = vector.broadcast %92 : vector<1x128xf32> to vector<16x128xf32>
    %94 = arith.addf %91, %93 : vector<16x128xf32>
    %cst_38 = arith.constant 0.000000e+00 : f32
    %95 = vector.broadcast %cst_38 : f32 to vector<16x128xf32>
    %96 = arith.cmpf ogt, %94, %95 : vector<16x128xf32>
    %cst_39 = arith.constant 0.000000e+00 : f32
    %97 = vector.broadcast %cst_39 : f32 to vector<16x128xf32>
    %98 = arith.minimumf %94, %97 : vector<16x128xf32>
    %99 = math.exp %98 : vector<16x128xf32>
    %cst_40 = arith.constant 1.000000e+00 : f32
    %100 = vector.broadcast %cst_40 : f32 to vector<16x128xf32>
    %101 = arith.subf %99, %100 : vector<16x128xf32>
    %102 = arith.select %96, %94, %101 : vector<16x128xi1>, vector<16x128xf32>
    %c328 = arith.constant 328 : index
    %c0_41 = arith.constant 0 : index
    %103 = vector.load %arg1[%c328, %c0_41] : memref<456x128xf32, #tpu.memory_space<vmem>>, vector<128x128xf32>
    %cst_42 = arith.constant dense<0.000000e+00> : vector<16x128xf32>
    %104 = tpu.matmul %102, %103, %cst_42 {dimension_numbers = #tpu.dot_dimension_numbers<[1], [0], [0], [1], [0, 0, 1, 1], [], []>} : vector<16x128xf32>, vector<128x128xf32>, vector<16x128xf32> -> vector<16x128xf32>
    %c16 = arith.constant 16 : index
    %c0_43 = arith.constant 0 : index
    %105 = vector.load %arg1[%c16, %c0_43] : memref<456x128xf32, #tpu.memory_space<vmem>>, vector<1x128xf32>
    %106 = vector.broadcast %105 : vector<1x128xf32> to vector<16x128xf32>
    %107 = arith.addf %104, %106 : vector<16x128xf32>
    %c0_44 = arith.constant 0 : index
    %c0_45 = arith.constant 0 : index
    %108 = vector.load %arg3[%c0_44, %c0_45] : memref<16x128xf32, #tpu.memory_space<vmem>>, vector<16x128xf32>
    tpu.vector_store %arg3[%c0_44, %c0_45], %107 {strides = array<i32>} : memref<16x128xf32, #tpu.memory_space<vmem>>, vector<16x128xf32>,
    return
  }
}

</mosaic_0001>

<llo_original>
// kernel: multi_head_gat_forward.1
$region0: #{multi_head_gat_forward.1}
  #allocation0 [shape = 'u32[]', space=smem, size = 0x4, offset = 0x4, fixed_abs, tag = 'smem constant byte address 0x4 - core index']
  #allocation1 [shape = 'u32[144,128]{1,0:T(1,128)}', space=vmem, size = 0x12000, scoped, tag = 'internal scratch']
  %s0 = inlined_call_operand.vmem [shape: f32[16,8], index: 0, kind: input, shape index: {}]
  %s1 = inlined_call_operand.hbm [shape: f32[456,128], index: 1, kind: input, shape index: {}]
  %s2 = inlined_call_operand.hbm [shape: f32[2,4,16,16], index: 2, kind: input, shape index: {}]
  %s3 = inlined_call_operand.vmem [shape: f32[16,128], index: 3, kind: output, shape index: {}]
  %s4 = sld [smem:[#allocation0]]
  $region30: #{multi_head_gat_forward.1} parent=0
    _
  %s6 = ssub.s32 1, %s4
  %s7 = scalar_select 0, %s6, %s4
  $region1: #{multi_head_gat_forward.1} parent=0
    #allocation2 [shape = 'u8[233472]{0}', space=vmem, size = 0x39000, scoped, tag = 'input window, operand 1, single buffered']
    #allocation3 [shape = 's32[1]{0}', space=sflag, size = 0x4, scoped, tag = 'scoped memory for multi_head_gat_forward.1']
    #allocation4 [shape = 'u8[65536]{0}', space=vmem, size = 0x10000, scoped, tag = 'input window, operand 2, single buffered']
    #allocation5 [shape = 's32[1]{0}', space=sflag, size = 0x4, scoped, tag = 'scoped memory for multi_head_gat_forward.1']
    %8 = vsyncpa [#allocation3], 0
    %9 = vsyncpa [#allocation5], 0
    // Predicated region
    $region2: #{multi_head_gat_forward.1} parent=1 // pred_check
      _
    $region3: #{multi_head_gat_forward.1} parent=1 // pred_check_branch
      %11 = sbr.rel (0) target = $region5
    $region4: #{multi_head_gat_forward.1} parent=1 // pred_region
      _
    $region5: #{multi_head_gat_forward.1} parent=1 // pred_fallthru
      _
    // Predicated region
    $region6: #{multi_head_gat_forward.1} parent=1 // pred_check
      _
    $region7: #{multi_head_gat_forward.1} parent=1 // pred_check_branch
      %13 = sbr.rel (0) target = $region9
    $region8: #{multi_head_gat_forward.1} parent=1 // pred_region
      %s15 = ssub.s32 7296, 7296
      %16 = vsyncadd [#allocation3], %s15
      %s17 = sshll.u32 [#allocation2], 4
      %s18 = int_to_ptr.vmem [resolvable:$true] %s17
      %23 = dma.hbm_to_vmem [thread:$0]  %s1, 7296, %s18, [#allocation3], 128, 128, 8
    $region9: #{multi_head_gat_forward.1} parent=1 // pred_fallthru
      _
    // Predicated region
    $region10: #{multi_head_gat_forward.1} parent=1 // pred_check
      _
    $region11: #{multi_head_gat_forward.1} parent=1 // pred_check_branch
      %25 = sbr.rel (0) target = $region13
    $region12: #{multi_head_gat_forward.1} parent=1 // pred_region
      %s27 = ssub.s32 2048, 2048
      %28 = vsyncadd [#allocation5], %s27
      %s29 = sshll.u32 [#allocation4], 4
      %s30 = int_to_ptr.vmem [resolvable:$true] %s29
      %35 = dma.hbm_to_vmem [thread:$0]  %s2, 2048, %s30, [#allocation5], 128, 128, 8
    $region13: #{multi_head_gat_forward.1} parent=1 // pred_fallthru
      _
    // Predicated region
    $region14: #{multi_head_gat_forward.1} parent=1 // pred_check
      _
    $region15: #{multi_head_gat_forward.1} parent=1 // pred_check_branch
      %37 = sbr.rel (0) target = $region17
    $region16: #{multi_head_gat_forward.1} parent=1 // pred_region
      %38 = dma.done [#allocation3], 7296
    $region17: #{multi_head_gat_forward.1} parent=1 // pred_fallthru
      _
    // Predicated region
    $region18: #{multi_head_gat_forward.1} parent=1 // pred_check
      _
    $region19: #{multi_head_gat_forward.1} parent=1 // pred_check_branch
      %40 = sbr.rel (0) target = $region21
    $region20: #{multi_head_gat_forward.1} parent=1 // pred_region
      %41 = dma.done [#allocation5], 2048
    $region21: #{multi_head_gat_forward.1} parent=1 // pred_fallthru
      _
    %v42 = vld [vmem:[#allocation2 + $0x38] sm:$0xf]
    %v45 = vunpack.c.l.s4 1966171168
    %v46 = vunpack.c.0.s8 %v45
    %v47 = vlaneseq
    %v48 = vshrl.u32 %v47, 7
    %v49 = vsub.s32 %v46, %v48
    %v50 = vrot.slane %v42, %v49
    %v51 = vcombine.high %v50, %v50
    %v53 = vunpack.c.l.s4 1966171168
    %v54 = vunpack.c.0.s8 %v53
    %v55 = vlaneseq
    %v56 = vshrl.u32 %v55, 7
    %v57 = vsub.s32 %v54, %v56
    %v58 = vrot.slane %v50, %v57
    %v60 = vunpack.c.l.s4 1966171168
    %v61 = vunpack.c.0.s8 %v60
    %v62 = vlaneseq
    %v63 = vshrl.u32 %v62, 7
    %v64 = vsub.s32 %v61, %v63
    %v65 = vrot.slane %v51, %v64
    %v66 = vcombine.high %v58, %v58
    %v67 = vcombine.high %v65, %v65
    %v68 = vld [vmem:[%s0] sm:$0xff]
    %v69 = vld [vmem:[%s0 + $0x8] sm:$0xff]
    %v70 = vld [vmem:[#allocation4] sm:$0xff]
    %v71 = vld [vmem:[#allocation4 + $0x8] sm:$0xff]
    %v72 = vld [vmem:[#allocation4 + $0x10] sm:$0xff]
    %v73 = vld [vmem:[#allocation4 + $0x18] sm:$0xff]
    %v74 = vld [vmem:[#allocation4 + $0x20] sm:$0xff]
    %v75 = vld [vmem:[#allocation4 + $0x28] sm:$0xff]
    %v76 = vld [vmem:[#allocation4 + $0x30] sm:$0xff]
    %v77 = vld [vmem:[#allocation4 + $0x38] sm:$0xff]
    %v78 = vld [vmem:[#allocation2 + $0x40] sm:$0xff]
    %vm79 = vcmask 64512
    %v81 = vsel %vm79, %v68, 0
    %v84 = vsel %vm79, %v69, 0
    %86 = vmatprep.subr.mxu0 0.0
    %87 = vmatpush1.msra.mxu0 %v78
    %88 = vmatprep.subr.mxu0 0.0
    %89 = vmatpush1.msra.mxu0 0.0
    %90 = vmatprep.subr.mxu0 0.0
    %91 = vmatpush1.msra.mxu0 0.0
    %92 = vmatprep.subr.mxu0 0.0
    %93 = vmatpush1.msra.mxu0 0.0
    %94 = vmatprep.subr.mxu0 0.0
    %95 = vmatpush1.msra.mxu0 0.0
    %96 = vmatprep.subr.mxu0 0.0
    %97 = vmatpush1.msra.mxu0 0.0
    %98 = vmatprep.subr.mxu0 0.0
    %99 = vmatpush1.msra.mxu0 0.0
    %100 = vmatprep.subr.mxu0 0.0
    %101 = vmatpush1.msra.mxu0 0.0
    %102 = vmatprep.subr.mxu0 0.0
    %103 = vmatpush1.msra.mxu0 0.0
    %104 = vmatprep.subr.mxu0 0.0
    %105 = vmatpush1.msra.mxu0 0.0
    %106 = vmatprep.subr.mxu0 0.0
    %107 = vmatpush1.msra.mxu0 0.0
    %108 = vmatprep.subr.mxu0 0.0
    %109 = vmatpush1.msra.mxu0 0.0
    %110 = vmatprep.subr.mxu0 0.0
    %111 = vmatpush1.msra.mxu0 0.0
    %112 = vmatprep.subr.mxu0 0.0
    %113 = vmatpush1.msra.mxu0 0.0
    %114 = vmatprep.subr.mxu0 0.0
    %115 = vmatpush1.msra.mxu0 0.0
    %116 = vmatprep.subr.mxu0 0.0
    %117 = vmatpush1.msra.mxu0 0.0
    %118 = vmatprep.subr.mxu0 0.0
    %119 = vmatpush1.msra.mxu0 0.0
    %120 = vmatprep.subr.mxu0 0.0
    %121 = vmatpush1.msra.mxu0 0.0
    %122 = vmatprep.subr.mxu0 0.0
    %123 = vmatpush1.msra.mxu0 0.0
    %124 = vmatprep.subr.mxu0 0.0
    %125 = vmatpush1.msra.mxu0 0.0
    %126 = vmatprep.subr.mxu0 0.0
    %127 = vmatpush1.msra.mxu0 0.0
    %128 = vmatprep.subr.mxu0 0.0
    %129 = vmatpush1.msra.mxu0 0.0
    %130 = vmatprep.subr.mxu0 0.0
    %131 = vmatpush1.msra.mxu0 0.0
    %132 = vmatprep.subr.mxu0 0.0
    %133 = vmatpush1.msra.mxu0 0.0
    %134 = vmatprep.subr.mxu0 0.0
    %135 = vmatpush1.msra.mxu0 0.0
    %136 = vmatprep.subr.mxu0 0.0
    %137 = vmatpush1.msra.mxu0 0.0
    %138 = vmatprep.subr.mxu0 0.0
    %139 = vmatpush1.msra.mxu0 0.0
    %140 = vmatprep.subr.mxu0 0.0
    %141 = vmatpush1.msra.mxu0 0.0
    %142 = vmatprep.subr.mxu0 0.0
    %143 = vmatpush1.msra.mxu0 0.0
    %144 = vmatprep.subr.mxu0 0.0
    %145 = vmatpush1.msra.mxu0 0.0
    %146 = vmatprep.subr.mxu0 0.0
    %147 = vmatpush1.msra.mxu0 0.0
    %148 = vmatprep.subr.mxu0 0.0
    %149 = vmatpush1.msra.mxu0 0.0
    %150 = vmatprep.mubr.f32.mxu0 0.0
    %151 = vmatmul.mubr.f32.gmra.mrb[0].mxu0 %v81
    %v152 = vpop.f32.mrb[0].mxu0
    %v153 = vadd.f32 0.0, %v152
    %v154 = vpop.f32.mrb[0].mxu0
    %155 = vmatprep.mubr.f32.mxu0 0.0
    %156 = vmatmul.mubr.f32.gmra.mrb[0].mxu0 %v84
    %v157 = vpop.f32.mrb[0].mxu0
    %v158 = vadd.f32 0.0, %v157
    %v159 = vpop.f32.mrb[0].mxu0
    %160 = vdwg.mxu0
    %v161 = vld [vmem:[#allocation2 + $0x18] sm:$0xf]
    %162 = vmatprep.subr.mxu0 0.0
    %163 = vmatpush1.xpose.msra.mxu0 %v153
    %164 = vmatprep.subr.mxu0 0.0
    %165 = vmatpush1.xpose.msra.mxu0 %v158
    %166 = vmatprep.subr.mxu0 0.0
    %167 = vmatpush1.xpose.msra.mxu0 0.0
    %168 = vmatprep.subr.mxu0 0.0
    %169 = vmatpush1.xpose.msra.mxu0 0.0
    %170 = vmatprep.subr.mxu0 0.0
    %171 = vmatpush1.xpose.msra.mxu0 0.0
    %172 = vmatprep.subr.mxu0 0.0
    %173 = vmatpush1.xpose.msra.mxu0 0.0
    %174 = vmatprep.subr.mxu0 0.0
    %175 = vmatpush1.xpose.msra.mxu0 0.0
    %176 = vmatprep.subr.mxu0 0.0
    %177 = vmatpush1.xpose.msra.mxu0 0.0
    %178 = vmatprep.subr.mxu0 0.0
    %179 = vmatpush1.xpose.msra.mxu0 0.0
    %180 = vmatprep.subr.mxu0 0.0
    %181 = vmatpush1.xpose.msra.mxu0 0.0
    %182 = vmatprep.subr.mxu0 0.0
    %183 = vmatpush1.xpose.msra.mxu0 0.0
    %184 = vmatprep.subr.mxu0 0.0
    %185 = vmatpush1.xpose.msra.mxu0 0.0
    %186 = vmatprep.subr.mxu0 0.0
    %187 = vmatpush1.xpose.msra.mxu0 0.0
    %188 = vmatprep.subr.mxu0 0.0
    %189 = vmatpush1.xpose.msra.mxu0 0.0
    %190 = vmatprep.subr.mxu0 0.0
    %191 = vmatpush1.xpose.msra.mxu0 0.0
    %192 = vmatprep.subr.mxu0 0.0
    %193 = vmatpush1.xpose.msra.mxu0 0.0
    %194 = vmatprep.subr.mxu0 0.0
    %195 = vmatpush1.xpose.msra.mxu0 0.0
    %196 = vmatprep.subr.mxu0 0.0
    %197 = vmatpush1.xpose.msra.mxu0 0.0
    %198 = vmatprep.subr.mxu0 0.0
    %199 = vmatpush1.xpose.msra.mxu0 0.0
    %200 = vmatprep.subr.mxu0 0.0
    %201 = vmatpush1.xpose.msra.mxu0 0.0
    %202 = vmatprep.subr.mxu0 0.0
    %203 = vmatpush1.xpose.msra.mxu0 0.0
    %204 = vmatprep.subr.mxu0 0.0
    %205 = vmatpush1.xpose.msra.mxu0 0.0
    %206 = vmatprep.subr.mxu0 0.0
    %207 = vmatpush1.xpose.msra.mxu0 0.0
    %208 = vmatprep.subr.mxu0 0.0
    %209 = vmatpush1.xpose.msra.mxu0 0.0
    %210 = vmatprep.subr.mxu0 0.0
    %211 = vmatpush1.xpose.msra.mxu0 0.0
    %212 = vmatprep.subr.mxu0 0.0
    %213 = vmatpush1.xpose.msra.mxu0 0.0
    %214 = vmatprep.subr.mxu0 0.0
    %215 = vmatpush1.xpose.msra.mxu0 0.0
    %216 = vmatprep.subr.mxu0 0.0
    %217 = vmatpush1.xpose.msra.mxu0 0.0
    %218 = vmatprep.subr.mxu0 0.0
    %219 = vmatpush1.xpose.msra.mxu0 0.0
    %220 = vmatprep.subr.mxu0 0.0
    %221 = vmatpush1.xpose.msra.mxu0 0.0
    %222 = vmatprep.subr.mxu0 0.0
    %223 = vmatpush1.xpose.msra.mxu0 0.0
    %224 = vmatprep.subr.mxu0 0.0
    %225 = vmatpush1.xpose.msra.mxu0 0.0
    %226 = vmatprep.mubr.f32.mxu0 0.0
    %227 = vmatmul.mubr.f32.gmra.mrb[0].mxu0 %v161
    %v228 = vpop.f32.mrb[0].mxu0
    %v229 = vadd.f32 0.0, %v228
    %v230 = vpop.f32.mrb[0].mxu0
    %231 = vdwg.mxu0
    %v232 = vld [vmem:[#allocation2 + $0x20] sm:$0xf]
    %v235 = vunpack.c.l.s4 1966171168
    %v236 = vunpack.c.0.s8 %v235
    %v237 = vlaneseq
    %v238 = vshrl.u32 %v237, 7
    %v239 = vsub.s32 %v236, %v238
    %v240 = vrot.slane %v232, %v239
    %v241 = vcombine.high %v240, %v240
    %v243 = vunpack.c.l.s4 1966171168
    %v244 = vunpack.c.0.s8 %v243
    %v245 = vlaneseq
    %v246 = vshrl.u32 %v245, 7
    %v247 = vsub.s32 %v244, %v246
    %v248 = vrot.slane %v240, %v247
    %v250 = vunpack.c.l.s4 1966171168
    %v251 = vunpack.c.0.s8 %v250
    %v252 = vlaneseq
    %v253 = vshrl.u32 %v252, 7
    %v254 = vsub.s32 %v251, %v253
    %v255 = vrot.slane %v241, %v254
    %v256 = vcombine.high %v248, %v248
    %v257 = vcombine.high %v255, %v255
    %v258 = vlaneseq
    %v259 = vshrl.u32 %v258, 7
    %v260 = vsub.s32 0, %v259
    %v261 = vrot.slane %v248, %v260
    %v262 = vlaneseq
    %v263 = vshrl.u32 %v262, 7
    %v264 = vsub.s32 0, %v263
    %v265 = vrot.slane %v255, %v264
    %v266 = vlaneseq
    %v267 = vshrl.u32 %v266, 7
    %v268 = vsub.s32 0, %v267
    %v269 = vrot.slane %v256, %v268
    %v270 = vlaneseq
    %v271 = vshrl.u32 %v270, 7
    %v272 = vsub.s32 0, %v271
    %v273 = vrot.slane %v257, %v272
    %v278 = vmul.f32 %v153, %v261
    %v279 = vmul.f32 %v158, %v261
    %v280 = vmul.f32 %v153, %v265
    %v281 = vmul.f32 %v158, %v265
    %v282 = vmul.f32 %v153, %v269
    %v283 = vmul.f32 %v158, %v269
    %v284 = vmul.f32 %v153, %v273
    %v285 = vmul.f32 %v158, %v273
    %286 = vadd.xlane.f32.xlu0 %v278
    %v287 = vpop.xlane.xlu0 %286
    %288 = vadd.xlane.f32.xlu0 %v279
    %v289 = vpop.xlane.xlu0 %288
    %290 = vadd.xlane.f32.xlu0 %v280
    %v291 = vpop.xlane.xlu0 %290
    %292 = vadd.xlane.f32.xlu0 %v281
    %v293 = vpop.xlane.xlu0 %292
    %294 = vadd.xlane.f32.xlu0 %v282
    %v295 = vpop.xlane.xlu0 %294
    %296 = vadd.xlane.f32.xlu0 %v283
    %v297 = vpop.xlane.xlu0 %296
    %298 = vadd.xlane.f32.xlu0 %v284
    %v299 = vpop.xlane.xlu0 %298
    %300 = vadd.xlane.f32.xlu0 %v285
    %v301 = vpop.xlane.xlu0 %300
    %v304 = vunpack.c.l.s4 1966171168
    %v305 = vunpack.c.0.s8 %v304
    %v306 = vlaneseq
    %v307 = vshrl.u32 %v306, 7
    %v308 = vsub.s32 %v305, %v307
    %v309 = vrot.slane %v229, %v308
    %v310 = vcombine.high %v309, %v309
    %v312 = vunpack.c.l.s4 1966171168
    %v313 = vunpack.c.0.s8 %v312
    %v314 = vlaneseq
    %v315 = vshrl.u32 %v314, 7
    %v316 = vsub.s32 %v313, %v315
    %v317 = vrot.slane %v309, %v316
    %v319 = vunpack.c.l.s4 1966171168
    %v320 = vunpack.c.0.s8 %v319
    %v321 = vlaneseq
    %v322 = vshrl.u32 %v321, 7
    %v323 = vsub.s32 %v320, %v322
    %v324 = vrot.slane %v310, %v323
    %v325 = vcombine.high %v317, %v317
    %v326 = vcombine.high %v324, %v324
    %v327 = vlaneseq
    %v328 = vshrl.u32 %v327, 7
    %v329 = vsub.s32 0, %v328
    %v330 = vrot.slane %v317, %v329
    %v331 = vlaneseq
    %v332 = vshrl.u32 %v331, 7
    %v333 = vsub.s32 0, %v332
    %v334 = vrot.slane %v324, %v333
    %v335 = vlaneseq
    %v336 = vshrl.u32 %v335, 7
    %v337 = vsub.s32 0, %v336
    %v338 = vrot.slane %v325, %v337
    %v339 = vlaneseq
    %v340 = vshrl.u32 %v339, 7
    %v341 = vsub.s32 0, %v340
    %v342 = vrot.slane %v326, %v341
    %v347 = vadd.f32 %v287, %v330
    %v348 = vadd.f32 %v289, %v330
    %v349 = vadd.f32 %v291, %v334
    %v350 = vadd.f32 %v293, %v334
    %v351 = vadd.f32 %v295, %v338
    %v352 = vadd.f32 %v297, %v338
    %v353 = vadd.f32 %v299, %v342
    %v354 = vadd.f32 %v301, %v342
    %v355 = vadd.f32 %v347, %v70
    %v356 = vadd.f32 %v348, %v71
    %v357 = vadd.f32 %v349, %v72
    %v358 = vadd.f32 %v350, %v73
    %v359 = vadd.f32 %v351, %v74
    %v360 = vadd.f32 %v352, %v75
    %v361 = vadd.f32 %v353, %v76
    %v362 = vadd.f32 %v354, %v77
    %v363 = vmul.f32 %v355, 0.2
    %v364 = vmul.f32 %v356, 0.2
    %v365 = vmul.f32 %v357, 0.2
    %v366 = vmul.f32 %v358, 0.2
    %v367 = vmul.f32 %v359, 0.2
    %v368 = vmul.f32 %v360, 0.2
    %v369 = vmul.f32 %v361, 0.2
    %v370 = vmul.f32 %v362, 0.2
    %v371 = vmax.f32 %v355, %v363
    %v372 = vmax.f32 %v356, %v364
    %v373 = vmax.f32 %v357, %v365
    %v374 = vmax.f32 %v358, %v366
    %v375 = vmax.f32 %v359, %v367
    %v376 = vmax.f32 %v360, %v368
    %v377 = vmax.f32 %v361, %v369
    %v378 = vmax.f32 %v362, %v370
    %vm379 = vcmask 130048
    %v380 = vsel %vm379, %v371, -inf
    %381 = vmax.xlane.f32.xlu0 %v380
    %v382 = vpop.xlane.xlu0 %381
    %v383 = vsel %vm379, %v372, -inf
    %384 = vmax.xlane.f32.xlu0 %v383
    %v385 = vpop.xlane.xlu0 %384
    %v386 = vsel %vm379, %v373, -inf
    %387 = vmax.xlane.f32.xlu0 %v386
    %v388 = vpop.xlane.xlu0 %387
    %v389 = vsel %vm379, %v374, -inf
    %390 = vmax.xlane.f32.xlu0 %v389
    %v391 = vpop.xlane.xlu0 %390
    %v392 = vsel %vm379, %v375, -inf
    %393 = vmax.xlane.f32.xlu0 %v392
    %v394 = vpop.xlane.xlu0 %393
    %v395 = vsel %vm379, %v376, -inf
    %396 = vmax.xlane.f32.xlu0 %v395
    %v397 = vpop.xlane.xlu0 %396
    %v398 = vsel %vm379, %v377, -inf
    %399 = vmax.xlane.f32.xlu0 %v398
    %v400 = vpop.xlane.xlu0 %399
    %v401 = vsel %vm379, %v378, -inf
    %402 = vmax.xlane.f32.xlu0 %v401
    %v403 = vpop.xlane.xlu0 %402
    %v404 = vsub.f32 %v371, %v382
    %v405 = vsub.f32 %v372, %v385
    %v406 = vsub.f32 %v373, %v388
    %v407 = vsub.f32 %v374, %v391
    %v408 = vsub.f32 %v375, %v394
    %v409 = vsub.f32 %v376, %v397
    %v410 = vsub.f32 %v377, %v400
    %v411 = vsub.f32 %v378, %v403
    %v412 = vmul.f32 %v404, 1.442695
    %v413 = vpow.pop %v412
    %v414 = vmul.f32 %v405, 1.442695
    %v415 = vpow.pop %v414
    %v416 = vmul.f32 %v406, 1.442695
    %v417 = vpow.pop %v416
    %v418 = vmul.f32 %v407, 1.442695
    %v419 = vpow.pop %v418
    %v420 = vmul.f32 %v408, 1.442695
    %v421 = vpow.pop %v420
    %v422 = vmul.f32 %v409, 1.442695
    %v423 = vpow.pop %v422
    %v424 = vmul.f32 %v410, 1.442695
    %v425 = vpow.pop %v424
    %v426 = vmul.f32 %v411, 1.442695
    %v427 = vpow.pop %v426
    %v428 = vsel %vm379, %v413, 0.0
    %429 = vadd.xlane.f32.xlu0 %v428
    %v430 = vpop.xlane.xlu0 %429
    %v431 = vsel %vm379, %v415, 0.0
    %432 = vadd.xlane.f32.xlu0 %v431
    %v433 = vpop.xlane.xlu0 %432
    %v434 = vsel %vm379, %v417, 0.0
    %435 = vadd.xlane.f32.xlu0 %v434
    %v436 = vpop.xlane.xlu0 %435
    %v437 = vsel %vm379, %v419, 0.0
    %438 = vadd.xlane.f32.xlu0 %v437
    %v439 = vpop.xlane.xlu0 %438
    %v440 = vsel %vm379, %v421, 0.0
    %441 = vadd.xlane.f32.xlu0 %v440
    %v442 = vpop.xlane.xlu0 %441
    %v443 = vsel %vm379, %v423, 0.0
    %444 = vadd.xlane.f32.xlu0 %v443
    %v445 = vpop.xlane.xlu0 %444
    %v446 = vsel %vm379, %v425, 0.0
    %447 = vadd.xlane.f32.xlu0 %v446
    %v448 = vpop.xlane.xlu0 %447
    %v449 = vsel %vm379, %v427, 0.0
    %450 = vadd.xlane.f32.xlu0 %v449
    %v451 = vpop.xlane.xlu0 %450
    %v452 = vrcp.pop %v430
    %v453 = vrcp.pop %v433
    %v454 = vrcp.pop %v436
    %v455 = vrcp.pop %v439
    %v456 = vrcp.pop %v442
    %v457 = vrcp.pop %v445
    %v458 = vrcp.pop %v448
    %v459 = vrcp.pop %v451
    %v460 = vmul.f32 %v413, %v452
    %v461 = vmul.f32 %v415, %v453
    %v462 = vmul.f32 %v417, %v454
    %v463 = vmul.f32 %v419, %v455
    %v464 = vmul.f32 %v421, %v456
    %v465 = vmul.f32 %v423, %v457
    %v466 = vmul.f32 %v425, %v458
    %v467 = vmul.f32 %v427, %v459
    %v469 = vsel %vm379, %v460, 0
    %v472 = vsel %vm379, %v461, 0
    %v475 = vsel %vm379, %v462, 0
    %v478 = vsel %vm379, %v463, 0
    %v481 = vsel %vm379, %v464, 0
    %v484 = vsel %vm379, %v465, 0
    %v487 = vsel %vm379, %v466, 0
    %v490 = vsel %vm379, %v467, 0
    %492 = vmatprep.subr.mxu0 0.0
    %493 = vmatpush1.msra.mxu0 %v153
    %494 = vmatprep.subr.mxu0 0.0
    %495 = vmatpush1.msra.mxu0 %v158
    %496 = vmatprep.subr.mxu0 0.0
    %497 = vmatpush1.msra.mxu0 0.0
    %498 = vmatprep.subr.mxu0 0.0
    %499 = vmatpush1.msra.mxu0 0.0
    %500 = vmatprep.subr.mxu0 0.0
    %501 = vmatpush1.msra.mxu0 0.0
    %502 = vmatprep.subr.mxu0 0.0
    %503 = vmatpush1.msra.mxu0 0.0
    %504 = vmatprep.subr.mxu0 0.0
    %505 = vmatpush1.msra.mxu0 0.0
    %506 = vmatprep.subr.mxu0 0.0
    %507 = vmatpush1.msra.mxu0 0.0
    %508 = vmatprep.subr.mxu0 0.0
    %509 = vmatpush1.msra.mxu0 0.0
    %510 = vmatprep.subr.mxu0 0.0
    %511 = vmatpush1.msra.mxu0 0.0
    %512 = vmatprep.subr.mxu0 0.0
    %513 = vmatpush1.msra.mxu0 0.0
    %514 = vmatprep.subr.mxu0 0.0
    %515 = vmatpush1.msra.mxu0 0.0
    %516 = vmatprep.subr.mxu0 0.0
    %517 = vmatpush1.msra.mxu0 0.0
    %518 = vmatprep.subr.mxu0 0.0
    %519 = vmatpush1.msra.mxu0 0.0
    %520 = vmatprep.subr.mxu0 0.0
    %521 = vmatpush1.msra.mxu0 0.0
    %522 = vmatprep.subr.mxu0 0.0
    %523 = vmatpush1.msra.mxu0 0.0
    %524 = vmatprep.subr.mxu0 0.0
    %525 = vmatpush1.msra.mxu0 0.0
    %526 = vmatprep.subr.mxu0 0.0
    %527 = vmatpush1.msra.mxu0 0.0
    %528 = vmatprep.subr.mxu0 0.0
    %529 = vmatpush1.msra.mxu0 0.0
    %530 = vmatprep.subr.mxu0 0.0
    %531 = vmatpush1.msra.mxu0 0.0
    %532 = vmatprep.subr.mxu0 0.0
    %533 = vmatpush1.msra.mxu0 0.0
    %534 = vmatprep.subr.mxu0 0.0
    %535 = vmatpush1.msra.mxu0 0.0
    %536 = vmatprep.subr.mxu0 0.0
    %537 = vmatpush1.msra.mxu0 0.0
    %538 = vmatprep.subr.mxu0 0.0
    %539 = vmatpush1.msra.mxu0 0.0
    %540 = vmatprep.subr.mxu0 0.0
    %541 = vmatpush1.msra.mxu0 0.0
    %542 = vmatprep.subr.mxu0 0.0
    %543 = vmatpush1.msra.mxu0 0.0
    %544 = vmatprep.subr.mxu0 0.0
    %545 = vmatpush1.msra.mxu0 0.0
    %546 = vmatprep.subr.mxu0 0.0
    %547 = vmatpush1.msra.mxu0 0.0
    %548 = vmatprep.subr.mxu0 0.0
    %549 = vmatpush1.msra.mxu0 0.0
    %550 = vmatprep.subr.mxu0 0.0
    %551 = vmatpush1.msra.mxu0 0.0
    %552 = vmatprep.subr.mxu0 0.0
    %553 = vmatpush1.msra.mxu0 0.0
    %554 = vmatprep.subr.mxu0 0.0
    %555 = vmatpush1.msra.mxu0 0.0
    %556 = vmatprep.mubr.f32.mxu0 0.0
    %557 = vmatmul.mubr.f32.gmra.mrb[0].mxu0 %v469
    %v558 = vpop.f32.mrb[0].mxu0
    %v559 = vadd.f32 0.0, %v558
    %v560 = vpop.f32.mrb[0].mxu0
    %561 = vmatprep.mubr.f32.mxu0 0.0
    %562 = vmatmul.mubr.f32.gmra.mrb[0].mxu0 %v472
    %v563 = vpop.f32.mrb[0].mxu0
    %v564 = vadd.f32 0.0, %v563
    %v565 = vpop.f32.mrb[0].mxu0
    %566 = vmatprep.mubr.f32.mxu0 0.0
    %567 = vmatmul.mubr.f32.gmra.mrb[0].mxu0 %v475
    %v568 = vpop.f32.mrb[0].mxu0
    %v569 = vadd.f32 0.0, %v568
    %v570 = vpop.f32.mrb[0].mxu0
    %571 = vmatprep.mubr.f32.mxu0 0.0
    %572 = vmatmul.mubr.f32.gmra.mrb[0].mxu0 %v478
    %v573 = vpop.f32.mrb[0].mxu0
    %v574 = vadd.f32 0.0, %v573
    %v575 = vpop.f32.mrb[0].mxu0
    %576 = vmatprep.mubr.f32.mxu0 0.0
    %577 = vmatmul.mubr.f32.gmra.mrb[0].mxu0 %v481
    %v578 = vpop.f32.mrb[0].mxu0
    %v579 = vadd.f32 0.0, %v578
    %v580 = vpop.f32.mrb[0].mxu0
    %581 = vmatprep.mubr.f32.mxu0 0.0
    %582 = vmatmul.mubr.f32.gmra.mrb[0].mxu0 %v484
    %v583 = vpop.f32.mrb[0].mxu0
    %v584 = vadd.f32 0.0, %v583
    %v585 = vpop.f32.mrb[0].mxu0
    %586 = vmatprep.mubr.f32.mxu0 0.0
    %587 = vmatmul.mubr.f32.gmra.mrb[0].mxu0 %v487
    %v588 = vpop.f32.mrb[0].mxu0
    %v589 = vadd.f32 0.0, %v588
    %v590 = vpop.f32.mrb[0].mxu0
    %591 = vmatprep.mubr.f32.mxu0 0.0
    %592 = vmatmul.mubr.f32.gmra.mrb[0].mxu0 %v490
    %v593 = vpop.f32.mrb[0].mxu0
    %v594 = vadd.f32 0.0, %v593
    %v595 = vpop.f32.mrb[0].mxu0
    %596 = vdwg.mxu0
    %v597 = vlaneseq
    %v598 = vshrl.u32 %v597, 7
    %v599 = vsub.s32 0, %v598
    %v600 = vrot.slane %v58, %v599
    %v601 = vlaneseq
    %v602 = vshrl.u32 %v601, 7
    %v603 = vsub.s32 0, %v602
    %v604 = vrot.slane %v65, %v603
    %v605 = vlaneseq
    %v606 = vshrl.u32 %v605, 7
    %v607 = vsub.s32 0, %v606
    %v608 = vrot.slane %v66, %v607
    %v609 = vlaneseq
    %v610 = vshrl.u32 %v609, 7
    %v611 = vsub.s32 0, %v610
    %v612 = vrot.slane %v67, %v611
    %v617 = vmul.f32 %v559, %v600
    %v618 = vmul.f32 %v564, %v600
    %v619 = vmul.f32 %v569, %v604
    %v620 = vmul.f32 %v574, %v604
    %v621 = vmul.f32 %v579, %v608
    %v622 = vmul.f32 %v584, %v608
    %v623 = vmul.f32 %v589, %v612
    %v624 = vmul.f32 %v594, %v612
    %v625 = vadd.f32 %v617, %v619
    %v626 = vadd.f32 %v625, %v621
    %v627 = vadd.f32 %v626, %v623
    %v628 = vadd.f32 %v618, %v620
    %v629 = vadd.f32 %v628, %v622
    %v630 = vadd.f32 %v629, %v624
    %v631 = vld [vmem:[#allocation2] sm:$0x1]
    %v632 = vlaneseq
    %v633 = vshrl.u32 %v632, 7
    %v634 = vsub.s32 0, %v633
    %v635 = vrot.slane %v631, %v634
    %v636 = vadd.f32 %v627, %v635
    %v637 = vadd.f32 %v630, %v635
    %vm638 = vcmp.gt.f32.partialorder %v636, 0.0
    %vm639 = vcmp.gt.f32.partialorder %v637, 0.0
    %v640 = vmin.f32 %v636, 0.0
    %v641 = vmin.f32 %v637, 0.0
    %v642 = vmul.f32 %v640, 1.442695
    %v643 = vpow.pop %v642
    %v644 = vmul.f32 %v641, 1.442695
    %v645 = vpow.pop %v644
    %v646 = vsub.f32 %v643, 1.0
    %v647 = vsub.f32 %v645, 1.0
    %v648 = vsel %vm638, %v636, %v646
    %v649 = vsel %vm639, %v637, %v647
    %s650 = scalar_lea.vmem [#allocation4], 64
    %v651 = vld [vmem:[%s650] sm:$0xff]
    %v652 = vld [vmem:[%s650 + $0x8] sm:$0xff]
    %v653 = vld [vmem:[%s650 + $0x10] sm:$0xff]
    %v654 = vld [vmem:[%s650 + $0x18] sm:$0xff]
    %v655 = vld [vmem:[%s650 + $0x20] sm:$0xff]
    %v656 = vld [vmem:[%s650 + $0x28] sm:$0xff]
    %v657 = vld [vmem:[%s650 + $0x30] sm:$0xff]
    %v658 = vld [vmem:[%s650 + $0x38] sm:$0xff]
    %v659 = vld [vmem:[#allocation2 + $0x48] sm:$0xff]
    %v660 = vld [vmem:[#allocation2 + $0x50] sm:$0xff]
    %v661 = vld [vmem:[#allocation2 + $0x58] sm:$0xff]
    %v662 = vld [vmem:[#allocation2 + $0x60] sm:$0xff]
    %v663 = vld [vmem:[#allocation2 + $0x68] sm:$0xff]
    %v664 = vld [vmem:[#allocation2 + $0x70] sm:$0xff]
    %v665 = vld [vmem:[#allocation2 + $0x78] sm:$0xff]
    %v666 = vld [vmem:[#allocation2 + $0x80] sm:$0xff]
    %v667 = vld [vmem:[#allocation2 + $0x88] sm:$0xff]
    %v668 = vld [vmem:[#allocation2 + $0x90] sm:$0xff]
    %v669 = vld [vmem:[#allocation2 + $0x98] sm:$0xff]
    %v670 = vld [vmem:[#allocation2 + $0xa0] sm:$0xff]
    %v671 = vld [vmem:[#allocation2 + $0xa8] sm:$0xff]
    %v672 = vld [vmem:[#allocation2 + $0xb0] sm:$0xff]
    %v673 = vld [vmem:[#allocation2 + $0xb8] sm:$0xff]
    %v674 = vld [vmem:[#allocation2 + $0xc0] sm:$0xff]
    %675 = vmatprep.subr.mxu0 0.0
    %676 = vmatpush1.msra.mxu0 %v659
    %677 = vmatprep.subr.mxu0 0.0
    %678 = vmatpush1.msra.mxu0 %v660
    %679 = vmatprep.subr.mxu0 0.0
    %680 = vmatpush1.msra.mxu0 %v661
    %681 = vmatprep.subr.mxu0 0.0
    %682 = vmatpush1.msra.mxu0 %v662
    %683 = vmatprep.subr.mxu0 0.0
    %684 = vmatpush1.msra.mxu0 %v663
    %685 = vmatprep.subr.mxu0 0.0
    %686 = vmatpush1.msra.mxu0 %v664
    %687 = vmatprep.subr.mxu0 0.0
    %688 = vmatpush1.msra.mxu0 %v665
    %689 = vmatprep.subr.mxu0 0.0
    %690 = vmatpush1.msra.mxu0 %v666
    %691 = vmatprep.subr.mxu0 0.0
    %692 = vmatpush1.msra.mxu0 %v667
    %693 = vmatprep.subr.mxu0 0.0
    %694 = vmatpush1.msra.mxu0 %v668
    %695 = vmatprep.subr.mxu0 0.0
    %696 = vmatpush1.msra.mxu0 %v669
    %697 = vmatprep.subr.mxu0 0.0
    %698 = vmatpush1.msra.mxu0 %v670
    %699 = vmatprep.subr.mxu0 0.0
    %700 = vmatpush1.msra.mxu0 %v671
    %701 = vmatprep.subr.mxu0 0.0
    %702 = vmatpush1.msra.mxu0 %v672
    %703 = vmatprep.subr.mxu0 0.0
    %704 = vmatpush1.msra.mxu0 %v673
    %705 = vmatprep.subr.mxu0 0.0
    %706 = vmatpush1.msra.mxu0 %v674
    %707 = vmatprep.subr.mxu0 0.0
    %708 = vmatpush1.msra.mxu0 0.0
    %709 = vmatprep.subr.mxu0 0.0
    %710 = vmatpush1.msra.mxu0 0.0
    %711 = vmatprep.subr.mxu0 0.0
    %712 = vmatpush1.msra.mxu0 0.0
    %713 = vmatprep.subr.mxu0 0.0
    %714 = vmatpush1.msra.mxu0 0.0
    %715 = vmatprep.subr.mxu0 0.0
    %716 = vmatpush1.msra.mxu0 0.0
    %717 = vmatprep.subr.mxu0 0.0
    %718 = vmatpush1.msra.mxu0 0.0
    %719 = vmatprep.subr.mxu0 0.0
    %720 = vmatpush1.msra.mxu0 0.0
    %721 = vmatprep.subr.mxu0 0.0
    %722 = vmatpush1.msra.mxu0 0.0
    %723 = vmatprep.subr.mxu0 0.0
    %724 = vmatpush1.msra.mxu0 0.0
    %725 = vmatprep.subr.mxu0 0.0
    %726 = vmatpush1.msra.mxu0 0.0
    %727 = vmatprep.subr.mxu0 0.0
    %728 = vmatpush1.msra.mxu0 0.0
    %729 = vmatprep.subr.mxu0 0.0
    %730 = vmatpush1.msra.mxu0 0.0
    %731 = vmatprep.subr.mxu0 0.0
    %732 = vmatpush1.msra.mxu0 0.0
    %733 = vmatprep.subr.mxu0 0.0
    %734 = vmatpush1.msra.mxu0 0.0
    %735 = vmatprep.subr.mxu0 0.0
    %736 = vmatpush1.msra.mxu0 0.0
    %737 = vmatprep.subr.mxu0 0.0
    %738 = vmatpush1.msra.mxu0 0.0
    %739 = vmatprep.mubr.f32.mxu0 0.0
    %740 = vmatmul.mubr.f32.gmra.mrb[0].mxu0 %v648
    %v741 = vpop.f32.mrb[0].mxu0
    %v742 = vadd.f32 0.0, %v741
    %v743 = vpop.f32.mrb[0].mxu0
    %744 = vmatprep.mubr.f32.mxu0 0.0
    %745 = vmatmul.mubr.f32.gmra.mrb[0].mxu0 %v649
    %v746 = vpop.f32.mrb[0].mxu0
    %v747 = vadd.f32 0.0, %v746
    %v748 = vpop.f32.mrb[0].mxu0
    %749 = vdwg.mxu0
    %v750 = vld [vmem:[#allocation2 + $0x28] sm:$0xf]
    %751 = vmatprep.subr.mxu0 0.0
    %752 = vmatpush1.xpose.msra.mxu0 %v742
    %753 = vmatprep.subr.mxu0 0.0
    %754 = vmatpush1.xpose.msra.mxu0 %v747
    %755 = vmatprep.subr.mxu0 0.0
    %756 = vmatpush1.xpose.msra.mxu0 0.0
    %757 = vmatprep.subr.mxu0 0.0
    %758 = vmatpush1.xpose.msra.mxu0 0.0
    %759 = vmatprep.subr.mxu0 0.0
    %760 = vmatpush1.xpose.msra.mxu0 0.0
    %761 = vmatprep.subr.mxu0 0.0
    %762 = vmatpush1.xpose.msra.mxu0 0.0
    %763 = vmatprep.subr.mxu0 0.0
    %764 = vmatpush1.xpose.msra.mxu0 0.0
    %765 = vmatprep.subr.mxu0 0.0
    %766 = vmatpush1.xpose.msra.mxu0 0.0
    %767 = vmatprep.subr.mxu0 0.0
    %768 = vmatpush1.xpose.msra.mxu0 0.0
    %769 = vmatprep.subr.mxu0 0.0
    %770 = vmatpush1.xpose.msra.mxu0 0.0
    %771 = vmatprep.subr.mxu0 0.0
    %772 = vmatpush1.xpose.msra.mxu0 0.0
    %773 = vmatprep.subr.mxu0 0.0
    %774 = vmatpush1.xpose.msra.mxu0 0.0
    %775 = vmatprep.subr.mxu0 0.0
    %776 = vmatpush1.xpose.msra.mxu0 0.0
    %777 = vmatprep.subr.mxu0 0.0
    %778 = vmatpush1.xpose.msra.mxu0 0.0
    %779 = vmatprep.subr.mxu0 0.0
    %780 = vmatpush1.xpose.msra.mxu0 0.0
    %781 = vmatprep.subr.mxu0 0.0
    %782 = vmatpush1.xpose.msra.mxu0 0.0
    %783 = vmatprep.subr.mxu0 0.0
    %784 = vmatpush1.xpose.msra.mxu0 0.0
    %785 = vmatprep.subr.mxu0 0.0
    %786 = vmatpush1.xpose.msra.mxu0 0.0
    %787 = vmatprep.subr.mxu0 0.0
    %788 = vmatpush1.xpose.msra.mxu0 0.0
    %789 = vmatprep.subr.mxu0 0.0
    %790 = vmatpush1.xpose.msra.mxu0 0.0
    %791 = vmatprep.subr.mxu0 0.0
    %792 = vmatpush1.xpose.msra.mxu0 0.0
    %793 = vmatprep.subr.mxu0 0.0
    %794 = vmatpush1.xpose.msra.mxu0 0.0
    %795 = vmatprep.subr.mxu0 0.0
    %796 = vmatpush1.xpose.msra.mxu0 0.0
    %797 = vmatprep.subr.mxu0 0.0
    %798 = vmatpush1.xpose.msra.mxu0 0.0
    %799 = vmatprep.subr.mxu0 0.0
    %800 = vmatpush1.xpose.msra.mxu0 0.0
    %801 = vmatprep.subr.mxu0 0.0
    %802 = vmatpush1.xpose.msra.mxu0 0.0
    %803 = vmatprep.subr.mxu0 0.0
    %804 = vmatpush1.xpose.msra.mxu0 0.0
    %805 = vmatprep.subr.mxu0 0.0
    %806 = vmatpush1.xpose.msra.mxu0 0.0
    %807 = vmatprep.subr.mxu0 0.0
    %808 = vmatpush1.xpose.msra.mxu0 0.0
    %809 = vmatprep.subr.mxu0 0.0
    %810 = vmatpush1.xpose.msra.mxu0 0.0
    %811 = vmatprep.subr.mxu0 0.0
    %812 = vmatpush1.xpose.msra.mxu0 0.0
    %813 = vmatprep.subr.mxu0 0.0
    %814 = vmatpush1.xpose.msra.mxu0 0.0
    %815 = vmatprep.mubr.f32.mxu0 0.0
    %816 = vmatmul.mubr.f32.gmra.mrb[0].mxu0 %v750
    %v817 = vpop.f32.mrb[0].mxu0
    %v818 = vadd.f32 0.0, %v817
    %v819 = vpop.f32.mrb[0].mxu0
    %820 = vdwg.mxu0
    %v821 = vld [vmem:[#allocation2 + $0x30] sm:$0xf]
    %v824 = vunpack.c.l.s4 1966171168
    %v825 = vunpack.c.0.s8 %v824
    %v826 = vlaneseq
    %v827 = vshrl.u32 %v826, 7
    %v828 = vsub.s32 %v825, %v827
    %v829 = vrot.slane %v821, %v828
    %v830 = vcombine.high %v829, %v829
    %v832 = vunpack.c.l.s4 1966171168
    %v833 = vunpack.c.0.s8 %v832
    %v834 = vlaneseq
    %v835 = vshrl.u32 %v834, 7
    %v836 = vsub.s32 %v833, %v835
    %v837 = vrot.slane %v829, %v836
    %v839 = vunpack.c.l.s4 1966171168
    %v840 = vunpack.c.0.s8 %v839
    %v841 = vlaneseq
    %v842 = vshrl.u32 %v841, 7
    %v843 = vsub.s32 %v840, %v842
    %v844 = vrot.slane %v830, %v843
    %v845 = vcombine.high %v837, %v837
    %v846 = vcombine.high %v844, %v844
    %v847 = vlaneseq
    %v848 = vshrl.u32 %v847, 7
    %v849 = vsub.s32 0, %v848
    %v850 = vrot.slane %v837, %v849
    %v851 = vlaneseq
    %v852 = vshrl.u32 %v851, 7
    %v853 = vsub.s32 0, %v852
    %v854 = vrot.slane %v844, %v853
    %v855 = vlaneseq
    %v856 = vshrl.u32 %v855, 7
    %v857 = vsub.s32 0, %v856
    %v858 = vrot.slane %v845, %v857
    %v859 = vlaneseq
    %v860 = vshrl.u32 %v859, 7
    %v861 = vsub.s32 0, %v860
    %v862 = vrot.slane %v846, %v861
    %v867 = vmul.f32 %v742, %v850
    %v868 = vmul.f32 %v747, %v850
    %v869 = vmul.f32 %v742, %v854
    %v870 = vmul.f32 %v747, %v854
    %v871 = vmul.f32 %v742, %v858
    %v872 = vmul.f32 %v747, %v858
    %v873 = vmul.f32 %v742, %v862
    %v874 = vmul.f32 %v747, %v862
    %875 = vadd.xlane.f32.xlu0 %v867
    %v876 = vpop.xlane.xlu0 %875
    %877 = vadd.xlane.f32.xlu0 %v868
    %v878 = vpop.xlane.xlu0 %877
    %879 = vadd.xlane.f32.xlu0 %v869
    %v880 = vpop.xlane.xlu0 %879
    %881 = vadd.xlane.f32.xlu0 %v870
    %v882 = vpop.xlane.xlu0 %881
    %883 = vadd.xlane.f32.xlu0 %v871
    %v884 = vpop.xlane.xlu0 %883
    %885 = vadd.xlane.f32.xlu0 %v872
    %v886 = vpop.xlane.xlu0 %885
    %887 = vadd.xlane.f32.xlu0 %v873
    %v888 = vpop.xlane.xlu0 %887
    %889 = vadd.xlane.f32.xlu0 %v874
    %v890 = vpop.xlane.xlu0 %889
    %v893 = vunpack.c.l.s4 1966171168
    %v894 = vunpack.c.0.s8 %v893
    %v895 = vlaneseq
    %v896 = vshrl.u32 %v895, 7
    %v897 = vsub.s32 %v894, %v896
    %v898 = vrot.slane %v818, %v897
    %v899 = vcombine.high %v898, %v898
    %v901 = vunpack.c.l.s4 1966171168
    %v902 = vunpack.c.0.s8 %v901
    %v903 = vlaneseq
    %v904 = vshrl.u32 %v903, 7
    %v905 = vsub.s32 %v902, %v904
    %v906 = vrot.slane %v898, %v905
    %v908 = vunpack.c.l.s4 1966171168
    %v909 = vunpack.c.0.s8 %v908
    %v910 = vlaneseq
    %v911 = vshrl.u32 %v910, 7
    %v912 = vsub.s32 %v909, %v911
    %v913 = vrot.slane %v899, %v912
    %v914 = vcombine.high %v906, %v906
    %v915 = vcombine.high %v913, %v913
    %v916 = vlaneseq
    %v917 = vshrl.u32 %v916, 7
    %v918 = vsub.s32 0, %v917
    %v919 = vrot.slane %v906, %v918
    %v920 = vlaneseq
    %v921 = vshrl.u32 %v920, 7
    %v922 = vsub.s32 0, %v921
    %v923 = vrot.slane %v913, %v922
    %v924 = vlaneseq
    %v925 = vshrl.u32 %v924, 7
    %v926 = vsub.s32 0, %v925
    %v927 = vrot.slane %v914, %v926
    %v928 = vlaneseq
    %v929 = vshrl.u32 %v928, 7
    %v930 = vsub.s32 0, %v929
    %v931 = vrot.slane %v915, %v930
    %v936 = vadd.f32 %v876, %v919
    %v937 = vadd.f32 %v878, %v919
    %v938 = vadd.f32 %v880, %v923
    %v939 = vadd.f32 %v882, %v923
    %v940 = vadd.f32 %v884, %v927
    %v941 = vadd.f32 %v886, %v927
    %v942 = vadd.f32 %v888, %v931
    %v943 = vadd.f32 %v890, %v931
    %v944 = vadd.f32 %v936, %v651
    %v945 = vadd.f32 %v937, %v652
    %v946 = vadd.f32 %v938, %v653
    %v947 = vadd.f32 %v939, %v654
    %v948 = vadd.f32 %v940, %v655
    %v949 = vadd.f32 %v941, %v656
    %v950 = vadd.f32 %v942, %v657
    %v951 = vadd.f32 %v943, %v658
    %v952 = vmul.f32 %v944, 0.2
    %v953 = vmul.f32 %v945, 0.2
    %v954 = vmul.f32 %v946, 0.2
    %v955 = vmul.f32 %v947, 0.2
    %v956 = vmul.f32 %v948, 0.2
    %v957 = vmul.f32 %v949, 0.2
    %v958 = vmul.f32 %v950, 0.2
    %v959 = vmul.f32 %v951, 0.2
    %v960 = vmax.f32 %v944, %v952
    %v961 = vmax.f32 %v945, %v953
    %v962 = vmax.f32 %v946, %v954
    %v963 = vmax.f32 %v947, %v955
    %v964 = vmax.f32 %v948, %v956
    %v965 = vmax.f32 %v949, %v957
    %v966 = vmax.f32 %v950, %v958
    %v967 = vmax.f32 %v951, %v959
    %v968 = vsel %vm379, %v960, -inf
    %969 = vmax.xlane.f32.xlu0 %v968
    %v970 = vpop.xlane.xlu0 %969
    %v971 = vsel %vm379, %v961, -inf
    %972 = vmax.xlane.f32.xlu0 %v971
    %v973 = vpop.xlane.xlu0 %972
    %v974 = vsel %vm379, %v962, -inf
    %975 = vmax.xlane.f32.xlu0 %v974
    %v976 = vpop.xlane.xlu0 %975
    %v977 = vsel %vm379, %v963, -inf
    %978 = vmax.xlane.f32.xlu0 %v977
    %v979 = vpop.xlane.xlu0 %978
    %v980 = vsel %vm379, %v964, -inf
    %981 = vmax.xlane.f32.xlu0 %v980
    %v982 = vpop.xlane.xlu0 %981
    %v983 = vsel %vm379, %v965, -inf
    %984 = vmax.xlane.f32.xlu0 %v983
    %v985 = vpop.xlane.xlu0 %984
    %v986 = vsel %vm379, %v966, -inf
    %987 = vmax.xlane.f32.xlu0 %v986
    %v988 = vpop.xlane.xlu0 %987
    %v989 = vsel %vm379, %v967, -inf
    %990 = vmax.xlane.f32.xlu0 %v989
    %v991 = vpop.xlane.xlu0 %990
    %v992 = vsub.f32 %v960, %v970
    %v993 = vsub.f32 %v961, %v973
    %v994 = vsub.f32 %v962, %v976
    %v995 = vsub.f32 %v963, %v979
    %v996 = vsub.f32 %v964, %v982
    %v997 = vsub.f32 %v965, %v985
    %v998 = vsub.f32 %v966, %v988
    %v999 = vsub.f32 %v967, %v991
    %v1000 = vmul.f32 %v992, 1.442695
    %v1001 = vpow.pop %v1000
    %v1002 = vmul.f32 %v993, 1.442695
    %v1003 = vpow.pop %v1002
    %v1004 = vmul.f32 %v994, 1.442695
    %v1005 = vpow.pop %v1004
    %v1006 = vmul.f32 %v995, 1.442695
    %v1007 = vpow.pop %v1006
    %v1008 = vmul.f32 %v996, 1.442695
    %v1009 = vpow.pop %v1008
    %v1010 = vmul.f32 %v997, 1.442695
    %v1011 = vpow.pop %v1010
    %v1012 = vmul.f32 %v998, 1.442695
    %v1013 = vpow.pop %v1012
    %v1014 = vmul.f32 %v999, 1.442695
    %v1015 = vpow.pop %v1014
    %v1016 = vsel %vm379, %v1001, 0.0
    %1017 = vadd.xlane.f32.xlu0 %v1016
    %v1018 = vpop.xlane.xlu0 %1017
    %v1019 = vsel %vm379, %v1003, 0.0
    %1020 = vadd.xlane.f32.xlu0 %v1019
    %v1021 = vpop.xlane.xlu0 %1020
    %v1022 = vsel %vm379, %v1005, 0.0
    %1023 = vadd.xlane.f32.xlu0 %v1022
    %v1024 = vpop.xlane.xlu0 %1023
    %v1025 = vsel %vm379, %v1007, 0.0
    %1026 = vadd.xlane.f32.xlu0 %v1025
    %v1027 = vpop.xlane.xlu0 %1026
    %v1028 = vsel %vm379, %v1009, 0.0
    %1029 = vadd.xlane.f32.xlu0 %v1028
    %v1030 = vpop.xlane.xlu0 %1029
    %v1031 = vsel %vm379, %v1011, 0.0
    %1032 = vadd.xlane.f32.xlu0 %v1031
    %v1033 = vpop.xlane.xlu0 %1032
    %v1034 = vsel %vm379, %v1013, 0.0
    %1035 = vadd.xlane.f32.xlu0 %v1034
    %v1036 = vpop.xlane.xlu0 %1035
    %v1037 = vsel %vm379, %v1015, 0.0
    %1038 = vadd.xlane.f32.xlu0 %v1037
    %v1039 = vpop.xlane.xlu0 %1038
    %v1040 = vrcp.pop %v1018
    %v1041 = vrcp.pop %v1021
    %v1042 = vrcp.pop %v1024
    %v1043 = vrcp.pop %v1027
    %v1044 = vrcp.pop %v1030
    %v1045 = vrcp.pop %v1033
    %v1046 = vrcp.pop %v1036
    %v1047 = vrcp.pop %v1039
    %v1048 = vmul.f32 %v1001, %v1040
    %v1049 = vmul.f32 %v1003, %v1041
    %v1050 = vmul.f32 %v1005, %v1042
    %v1051 = vmul.f32 %v1007, %v1043
    %v1052 = vmul.f32 %v1009, %v1044
    %v1053 = vmul.f32 %v1011, %v1045
    %v1054 = vmul.f32 %v1013, %v1046
    %v1055 = vmul.f32 %v1015, %v1047
    %v1057 = vsel %vm379, %v1048, 0
    %v1060 = vsel %vm379, %v1049, 0
    %v1063 = vsel %vm379, %v1050, 0
    %v1066 = vsel %vm379, %v1051, 0
    %v1069 = vsel %vm379, %v1052, 0
    %v1072 = vsel %vm379, %v1053, 0
    %v1075 = vsel %vm379, %v1054, 0
    %v1078 = vsel %vm379, %v1055, 0
    %1080 = vmatprep.subr.mxu0 0.0
    %1081 = vmatpush1.msra.mxu0 %v742
    %1082 = vmatprep.subr.mxu0 0.0
    %1083 = vmatpush1.msra.mxu0 %v747
    %1084 = vmatprep.subr.mxu0 0.0
    %1085 = vmatpush1.msra.mxu0 0.0
    %1086 = vmatprep.subr.mxu0 0.0
    %1087 = vmatpush1.msra.mxu0 0.0
    %1088 = vmatprep.subr.mxu0 0.0
    %1089 = vmatpush1.msra.mxu0 0.0
    %1090 = vmatprep.subr.mxu0 0.0
    %1091 = vmatpush1.msra.mxu0 0.0
    %1092 = vmatprep.subr.mxu0 0.0
    %1093 = vmatpush1.msra.mxu0 0.0
    %1094 = vmatprep.subr.mxu0 0.0
    %1095 = vmatpush1.msra.mxu0 0.0
    %1096 = vmatprep.subr.mxu0 0.0
    %1097 = vmatpush1.msra.mxu0 0.0
    %1098 = vmatprep.subr.mxu0 0.0
    %1099 = vmatpush1.msra.mxu0 0.0
    %1100 = vmatprep.subr.mxu0 0.0
    %1101 = vmatpush1.msra.mxu0 0.0
    %1102 = vmatprep.subr.mxu0 0.0
    %1103 = vmatpush1.msra.mxu0 0.0
    %1104 = vmatprep.subr.mxu0 0.0
    %1105 = vmatpush1.msra.mxu0 0.0
    %1106 = vmatprep.subr.mxu0 0.0
    %1107 = vmatpush1.msra.mxu0 0.0
    %1108 = vmatprep.subr.mxu0 0.0
    %1109 = vmatpush1.msra.mxu0 0.0
    %1110 = vmatprep.subr.mxu0 0.0
    %1111 = vmatpush1.msra.mxu0 0.0
    %1112 = vmatprep.subr.mxu0 0.0
    %1113 = vmatpush1.msra.mxu0 0.0
    %1114 = vmatprep.subr.mxu0 0.0
    %1115 = vmatpush1.msra.mxu0 0.0
    %1116 = vmatprep.subr.mxu0 0.0
    %1117 = vmatpush1.msra.mxu0 0.0
    %1118 = vmatprep.subr.mxu0 0.0
    %1119 = vmatpush1.msra.mxu0 0.0
    %1120 = vmatprep.subr.mxu0 0.0
    %1121 = vmatpush1.msra.mxu0 0.0
    %1122 = vmatprep.subr.mxu0 0.0
    %1123 = vmatpush1.msra.mxu0 0.0
    %1124 = vmatprep.subr.mxu0 0.0
    %1125 = vmatpush1.msra.mxu0 0.0
    %1126 = vmatprep.subr.mxu0 0.0
    %1127 = vmatpush1.msra.mxu0 0.0
    %1128 = vmatprep.subr.mxu0 0.0
    %1129 = vmatpush1.msra.mxu0 0.0
    %1130 = vmatprep.subr.mxu0 0.0
    %1131 = vmatpush1.msra.mxu0 0.0
    %1132 = vmatprep.subr.mxu0 0.0
    %1133 = vmatpush1.msra.mxu0 0.0
    %1134 = vmatprep.subr.mxu0 0.0
    %1135 = vmatpush1.msra.mxu0 0.0
    %1136 = vmatprep.subr.mxu0 0.0
    %1137 = vmatpush1.msra.mxu0 0.0
    %1138 = vmatprep.subr.mxu0 0.0
    %1139 = vmatpush1.msra.mxu0 0.0
    %1140 = vmatprep.subr.mxu0 0.0
    %1141 = vmatpush1.msra.mxu0 0.0
    %1142 = vmatprep.subr.mxu0 0.0
    %1143 = vmatpush1.msra.mxu0 0.0
    %1144 = vmatprep.mubr.f32.mxu0 0.0
    %1145 = vmatmul.mubr.f32.gmra.mrb[0].mxu0 %v1057
    %v1146 = vpop.f32.mrb[0].mxu0
    %v1147 = vadd.f32 0.0, %v1146
    %v1148 = vpop.f32.mrb[0].mxu0
    %1149 = vmatprep.mubr.f32.mxu0 0.0
    %1150 = vmatmul.mubr.f32.gmra.mrb[0].mxu0 %v1060
    %v1151 = vpop.f32.mrb[0].mxu0
    %v1152 = vadd.f32 0.0, %v1151
    %v1153 = vpop.f32.mrb[0].mxu0
    %1154 = vmatprep.mubr.f32.mxu0 0.0
    %1155 = vmatmul.mubr.f32.gmra.mrb[0].mxu0 %v1063
    %v1156 = vpop.f32.mrb[0].mxu0
    %v1157 = vadd.f32 0.0, %v1156
    %v1158 = vpop.f32.mrb[0].mxu0
    %1159 = vmatprep.mubr.f32.mxu0 0.0
    %1160 = vmatmul.mubr.f32.gmra.mrb[0].mxu0 %v1066
    %v1161 = vpop.f32.mrb[0].mxu0
    %v1162 = vadd.f32 0.0, %v1161
    %v1163 = vpop.f32.mrb[0].mxu0
    %1164 = vmatprep.mubr.f32.mxu0 0.0
    %1165 = vmatmul.mubr.f32.gmra.mrb[0].mxu0 %v1069
    %v1166 = vpop.f32.mrb[0].mxu0
    %v1167 = vadd.f32 0.0, %v1166
    %v1168 = vpop.f32.mrb[0].mxu0
    %1169 = vmatprep.mubr.f32.mxu0 0.0
    %1170 = vmatmul.mubr.f32.gmra.mrb[0].mxu0 %v1072
    %v1171 = vpop.f32.mrb[0].mxu0
    %v1172 = vadd.f32 0.0, %v1171
    %v1173 = vpop.f32.mrb[0].mxu0
    %1174 = vmatprep.mubr.f32.mxu0 0.0
    %1175 = vmatmul.mubr.f32.gmra.mrb[0].mxu0 %v1075
    %v1176 = vpop.f32.mrb[0].mxu0
    %v1177 = vadd.f32 0.0, %v1176
    %v1178 = vpop.f32.mrb[0].mxu0
    %1179 = vmatprep.mubr.f32.mxu0 0.0
    %1180 = vmatmul.mubr.f32.gmra.mrb[0].mxu0 %v1078
    %v1181 = vpop.f32.mrb[0].mxu0
    %v1182 = vadd.f32 0.0, %v1181
    %v1183 = vpop.f32.mrb[0].mxu0
    %1184 = vdwg.mxu0
    %v1185 = vmul.f32 %v1147, %v600
    %v1186 = vmul.f32 %v1152, %v600
    %v1187 = vmul.f32 %v1157, %v604
    %v1188 = vmul.f32 %v1162, %v604
    %v1189 = vmul.f32 %v1167, %v608
    %v1190 = vmul.f32 %v1172, %v608
    %v1191 = vmul.f32 %v1177, %v612
    %v1192 = vmul.f32 %v1182, %v612
    %v1193 = vadd.f32 %v1185, %v1187
    %v1194 = vadd.f32 %v1193, %v1189
    %v1195 = vadd.f32 %v1194, %v1191
    %v1196 = vadd.f32 %v1186, %v1188
    %v1197 = vadd.f32 %v1196, %v1190
    %v1198 = vadd.f32 %v1197, %v1192
    %v1199 = vld [vmem:[#allocation2 + $0xc8] sm:$0xff]
    %v1200 = vld [vmem:[#allocation2 + $0xd0] sm:$0xff]
    %v1201 = vld [vmem:[#allocation2 + $0xd8] sm:$0xff]
    %v1202 = vld [vmem:[#allocation2 + $0xe0] sm:$0xff]
    %v1203 = vld [vmem:[#allocation2 + $0xe8] sm:$0xff]
    %v1204 = vld [vmem:[#allocation2 + $0xf0] sm:$0xff]
    %v1205 = vld [vmem:[#allocation2 + $0xf8] sm:$0xff]
    %v1206 = vld [vmem:[#allocation2 + $0x100] sm:$0xff]
    %v1207 = vld [vmem:[#allocation2 + $0x108] sm:$0xff]
    %v1208 = vld [vmem:[#allocation2 + $0x110] sm:$0xff]
    %v1209 = vld [vmem:[#allocation2 + $0x118] sm:$0xff]
    %v1210 = vld [vmem:[#allocation2 + $0x120] sm:$0xff]
    %v1211 = vld [vmem:[#allocation2 + $0x128] sm:$0xff]
    %v1212 = vld [vmem:[#allocation2 + $0x130] sm:$0xff]
    %v1213 = vld [vmem:[#allocation2 + $0x138] sm:$0xff]
    %v1214 = vld [vmem:[#allocation2 + $0x140] sm:$0xff]
    %v1215 = vld [vmem:[#allocation2 + $0x8] sm:$0x1]
    %v1216 = vlaneseq
    %v1217 = vshrl.u32 %v1216, 7
    %v1218 = vsub.s32 0, %v1217
    %v1219 = vrot.slane %v1215, %v1218
    %1220 = vmatprep.subr.mxu0 0.0
    %1221 = vmatpush1.msra.mxu0 %v1199
    %1222 = vmatprep.subr.mxu0 0.0
    %1223 = vmatpush1.msra.mxu0 %v1200
    %1224 = vmatprep.subr.mxu0 0.0
    %1225 = vmatpush1.msra.mxu0 %v1201
    %1226 = vmatprep.subr.mxu0 0.0
    %1227 = vmatpush1.msra.mxu0 %v1202
    %1228 = vmatprep.subr.mxu0 0.0
    %1229 = vmatpush1.msra.mxu0 %v1203
    %1230 = vmatprep.subr.mxu0 0.0
    %1231 = vmatpush1.msra.mxu0 %v1204
    %1232 = vmatprep.subr.mxu0 0.0
    %1233 = vmatpush1.msra.mxu0 %v1205
    %1234 = vmatprep.subr.mxu0 0.0
    %1235 = vmatpush1.msra.mxu0 %v1206
    %1236 = vmatprep.subr.mxu0 0.0
    %1237 = vmatpush1.msra.mxu0 %v1207
    %1238 = vmatprep.subr.mxu0 0.0
    %1239 = vmatpush1.msra.mxu0 %v1208
    %1240 = vmatprep.subr.mxu0 0.0
    %1241 = vmatpush1.msra.mxu0 %v1209
    %1242 = vmatprep.subr.mxu0 0.0
    %1243 = vmatpush1.msra.mxu0 %v1210
    %1244 = vmatprep.subr.mxu0 0.0
    %1245 = vmatpush1.msra.mxu0 %v1211
    %1246 = vmatprep.subr.mxu0 0.0
    %1247 = vmatpush1.msra.mxu0 %v1212
    %1248 = vmatprep.subr.mxu0 0.0
    %1249 = vmatpush1.msra.mxu0 %v1213
    %1250 = vmatprep.subr.mxu0 0.0
    %1251 = vmatpush1.msra.mxu0 %v1214
    %1252 = vmatprep.subr.mxu0 0.0
    %1253 = vmatpush1.msra.mxu0 0.0
    %1254 = vmatprep.subr.mxu0 0.0
    %1255 = vmatpush1.msra.mxu0 0.0
    %1256 = vmatprep.subr.mxu0 0.0
    %1257 = vmatpush1.msra.mxu0 0.0
    %1258 = vmatprep.subr.mxu0 0.0
    %1259 = vmatpush1.msra.mxu0 0.0
    %1260 = vmatprep.subr.mxu0 0.0
    %1261 = vmatpush1.msra.mxu0 0.0
    %1262 = vmatprep.subr.mxu0 0.0
    %1263 = vmatpush1.msra.mxu0 0.0
    %1264 = vmatprep.subr.mxu0 0.0
    %1265 = vmatpush1.msra.mxu0 0.0
    %1266 = vmatprep.subr.mxu0 0.0
    %1267 = vmatpush1.msra.mxu0 0.0
    %1268 = vmatprep.subr.mxu0 0.0
    %1269 = vmatpush1.msra.mxu0 0.0
    %1270 = vmatprep.subr.mxu0 0.0
    %1271 = vmatpush1.msra.mxu0 0.0
    %1272 = vmatprep.subr.mxu0 0.0
    %1273 = vmatpush1.msra.mxu0 0.0
    %1274 = vmatprep.subr.mxu0 0.0
    %1275 = vmatpush1.msra.mxu0 0.0
    %1276 = vmatprep.subr.mxu0 0.0
    %1277 = vmatpush1.msra.mxu0 0.0
    %1278 = vmatprep.subr.mxu0 0.0
    %1279 = vmatpush1.msra.mxu0 0.0
    %1280 = vmatprep.subr.mxu0 0.0
    %1281 = vmatpush1.msra.mxu0 0.0
    %1282 = vmatprep.subr.mxu0 0.0
    %1283 = vmatpush1.msra.mxu0 0.0
    %1284 = vmatprep.mubr.f32.mxu0 0.0
    %1285 = vmatmul.mubr.f32.gmra.mrb[0].mxu0 %v1195
    %v1286 = vpop.f32.mrb[0].mxu0
    %v1287 = vadd.f32 %v1219, %v1286
    %v1288 = vpop.f32.mrb[0].mxu0
    %1289 = vmatprep.mubr.f32.mxu0 0.0
    %1290 = vmatmul.mubr.f32.gmra.mrb[0].mxu0 %v1198
    %v1291 = vpop.f32.mrb[0].mxu0
    %v1292 = vadd.f32 %v1219, %v1291
    %v1293 = vpop.f32.mrb[0].mxu0
    %1294 = vdwg.mxu0
    %vm1295 = vcmp.gt.f32.partialorder %v1287, 0.0
    %vm1296 = vcmp.gt.f32.partialorder %v1292, 0.0
    %v1297 = vmin.f32 %v1287, 0.0
    %v1298 = vmin.f32 %v1292, 0.0
    %v1299 = vmul.f32 %v1297, 1.442695
    %v1300 = vpow.pop %v1299
    %v1301 = vmul.f32 %v1298, 1.442695
    %v1302 = vpow.pop %v1301
    %v1303 = vsub.f32 %v1300, 1.0
    %v1304 = vsub.f32 %v1302, 1.0
    %v1305 = vsel %vm1295, %v1287, %v1303
    %v1306 = vsel %vm1296, %v1292, %v1304
    %v1307 = vld [vmem:[#allocation2 + $0x148] sm:$0xff]
    %v1308 = vld [vmem:[#allocation2 + $0x150] sm:$0xff]
    %v1309 = vld [vmem:[#allocation2 + $0x158] sm:$0xff]
    %v1310 = vld [vmem:[#allocation2 + $0x160] sm:$0xff]
    %v1311 = vld [vmem:[#allocation2 + $0x168] sm:$0xff]
    %v1312 = vld [vmem:[#allocation2 + $0x170] sm:$0xff]
    %v1313 = vld [vmem:[#allocation2 + $0x178] sm:$0xff]
    %v1314 = vld [vmem:[#allocation2 + $0x180] sm:$0xff]
    %v1315 = vld [vmem:[#allocation2 + $0x188] sm:$0xff]
    %v1316 = vld [vmem:[#allocation2 + $0x190] sm:$0xff]
    %v1317 = vld [vmem:[#allocation2 + $0x198] sm:$0xff]
    %v1318 = vld [vmem:[#allocation2 + $0x1a0] sm:$0xff]
    %v1319 = vld [vmem:[#allocation2 + $0x1a8] sm:$0xff]
    %v1320 = vld [vmem:[#allocation2 + $0x1b0] sm:$0xff]
    %v1321 = vld [vmem:[#allocation2 + $0x1b8] sm:$0xff]
    %v1322 = vld [vmem:[#allocation2 + $0x1c0] sm:$0xff]
    %v1323 = vld [vmem:[#allocation2 + $0x10] sm:$0x1]
    %v1324 = vlaneseq
    %v1325 = vshrl.u32 %v1324, 7
    %v1326 = vsub.s32 0, %v1325
    %v1327 = vrot.slane %v1323, %v1326
    %1328 = vmatprep.subr.mxu0 0.0
    %1329 = vmatpush1.msra.mxu0 %v1307
    %1330 = vmatprep.subr.mxu0 0.0
    %1331 = vmatpush1.msra.mxu0 %v1308
    %1332 = vmatprep.subr.mxu0 0.0
    %1333 = vmatpush1.msra.mxu0 %v1309
    %1334 = vmatprep.subr.mxu0 0.0
    %1335 = vmatpush1.msra.mxu0 %v1310
    %1336 = vmatprep.subr.mxu0 0.0
    %1337 = vmatpush1.msra.mxu0 %v1311
    %1338 = vmatprep.subr.mxu0 0.0
    %1339 = vmatpush1.msra.mxu0 %v1312
    %1340 = vmatprep.subr.mxu0 0.0
    %1341 = vmatpush1.msra.mxu0 %v1313
    %1342 = vmatprep.subr.mxu0 0.0
    %1343 = vmatpush1.msra.mxu0 %v1314
    %1344 = vmatprep.subr.mxu0 0.0
    %1345 = vmatpush1.msra.mxu0 %v1315
    %1346 = vmatprep.subr.mxu0 0.0
    %1347 = vmatpush1.msra.mxu0 %v1316
    %1348 = vmatprep.subr.mxu0 0.0
    %1349 = vmatpush1.msra.mxu0 %v1317
    %1350 = vmatprep.subr.mxu0 0.0
    %1351 = vmatpush1.msra.mxu0 %v1318
    %1352 = vmatprep.subr.mxu0 0.0
    %1353 = vmatpush1.msra.mxu0 %v1319
    %1354 = vmatprep.subr.mxu0 0.0
    %1355 = vmatpush1.msra.mxu0 %v1320
    %1356 = vmatprep.subr.mxu0 0.0
    %1357 = vmatpush1.msra.mxu0 %v1321
    %1358 = vmatprep.subr.mxu0 0.0
    %1359 = vmatpush1.msra.mxu0 %v1322
    %1360 = vmatprep.subr.mxu0 0.0
    %1361 = vmatpush1.msra.mxu0 0.0
    %1362 = vmatprep.subr.mxu0 0.0
    %1363 = vmatpush1.msra.mxu0 0.0
    %1364 = vmatprep.subr.mxu0 0.0
    %1365 = vmatpush1.msra.mxu0 0.0
    %1366 = vmatprep.subr.mxu0 0.0
    %1367 = vmatpush1.msra.mxu0 0.0
    %1368 = vmatprep.subr.mxu0 0.0
    %1369 = vmatpush1.msra.mxu0 0.0
    %1370 = vmatprep.subr.mxu0 0.0
    %1371 = vmatpush1.msra.mxu0 0.0
    %1372 = vmatprep.subr.mxu0 0.0
    %1373 = vmatpush1.msra.mxu0 0.0
    %1374 = vmatprep.subr.mxu0 0.0
    %1375 = vmatpush1.msra.mxu0 0.0
    %1376 = vmatprep.subr.mxu0 0.0
    %1377 = vmatpush1.msra.mxu0 0.0
    %1378 = vmatprep.subr.mxu0 0.0
    %1379 = vmatpush1.msra.mxu0 0.0
    %1380 = vmatprep.subr.mxu0 0.0
    %1381 = vmatpush1.msra.mxu0 0.0
    %1382 = vmatprep.subr.mxu0 0.0
    %1383 = vmatpush1.msra.mxu0 0.0
    %1384 = vmatprep.subr.mxu0 0.0
    %1385 = vmatpush1.msra.mxu0 0.0
    %1386 = vmatprep.subr.mxu0 0.0
    %1387 = vmatpush1.msra.mxu0 0.0
    %1388 = vmatprep.subr.mxu0 0.0
    %1389 = vmatpush1.msra.mxu0 0.0
    %1390 = vmatprep.subr.mxu0 0.0
    %1391 = vmatpush1.msra.mxu0 0.0
    %1392 = vmatprep.mubr.f32.mxu0 0.0
    %1393 = vmatmul.mubr.f32.gmra.mrb[0].mxu0 %v1305
    %v1394 = vpop.f32.mrb[0].mxu0
    %v1395 = vadd.f32 %v1327, %v1394
    %v1396 = vpop.f32.mrb[0].mxu0
    %1397 = vmatprep.mubr.f32.mxu0 0.0
    %1398 = vmatmul.mubr.f32.gmra.mrb[0].mxu0 %v1306
    %v1399 = vpop.f32.mrb[0].mxu0
    %v1400 = vadd.f32 %v1327, %v1399
    %v1401 = vpop.f32.mrb[0].mxu0
    %1402 = vdwg.mxu0
    %1403 = vst [vmem:[%s3] sm:$0xff] %v1395
    %1404 = vst [vmem:[%s3 + $0x8] sm:$0xff] %v1400
    // Predicated region
    $region22: #{multi_head_gat_forward.1} parent=1 // pred_check
      _
    $region23: #{multi_head_gat_forward.1} parent=1 // pred_check_branch
      %1406 = sbr.rel (0) target = $region25
    $region24: #{multi_head_gat_forward.1} parent=1 // pred_region
      _
    $region25: #{multi_head_gat_forward.1} parent=1 // pred_fallthru
      _
    // Predicated region
    $region26: #{multi_head_gat_forward.1} parent=1 // pred_check
      _
    $region27: #{multi_head_gat_forward.1} parent=1 // pred_check_branch
      %1408 = sbr.rel (0) target = $region29
    $region28: #{multi_head_gat_forward.1} parent=1 // pred_region
      _
    $region29: #{multi_head_gat_forward.1} parent=1 // pred_fallthru
      _
    %1409 = vsyncpa [#allocation3], 1
    %1410 = vsyncpa [#allocation5], 1

</llo_original>
